<compile_context>
chip_gen: v7x
topology: tpu7x:2x2x1
jax: 0.10.0
libtpu: 0.0.40
codegen_flags: <defaults>
</compile_context>

<pallas_src>
import functools

import jax
import jax.numpy as jnp
from jax.experimental import pallas as pl
from jax.experimental.pallas import tpu as pltpu

EPS = 1e-5                       # torch BatchNorm2d default
LANE = 128                       # TPU lane width — channel padding granule
VMEM_LIMIT = 32 * 1024 * 1024    # scoped-VMEM budget; safe on v7x (64 MiB phys)


def _round_up(x, m):
    return ((x + m - 1) // m) * m


def _cparams(*sem):
    return pltpu.CompilerParams(dimension_semantics=sem,
                                vmem_limit_bytes=VMEM_LIMIT)


def _pick_tile(dim, pref, align):
    """Largest tile <= pref that divides `dim` and is a multiple of `align`
    (TPU (8,128) layout rule); falls back to the full dimension."""
    if dim <= pref:
        return dim
    t = (pref // align) * align
    while t >= align:
        if dim % t == 0:
            return t
        t -= align
    return dim


def _split_for_two(dim, tile, align):
    """Largest aligned tile <= tile//2 dividing `dim` (so the axis gets >= 2
    grid blocks → both v7x TensorCores busy).  Returns `tile` if impossible."""
    t = (tile // 2 // align) * align
    while t >= align:
        if dim % t == 0:
            return t
        t -= align
    return tile


# --------------------------------------------------------------------------
# Tiled matmul kernel with fused BatchNorm statistics epilogue
# --------------------------------------------------------------------------
def _matmul_bn_stats_kernel(a_ref, b_ref, o_ref, s1_ref, s2_ref, acc_ref):
    k = pl.program_id(2)

    @pl.when(k == 0)
    def _():
        acc_ref[...] = jnp.zeros_like(acc_ref)

    acc_ref[...] += jnp.dot(a_ref[...], b_ref[...],
                            preferred_element_type=jnp.float32)

    @pl.when(k == pl.num_programs(2) - 1)
    def _():
        acc = acc_ref[...]
        o_ref[...] = acc.astype(o_ref.dtype)
        # Per-(M-tile) channel sum / sum-of-squares, straight from the f32
        # accumulator; written as two separate lane-dense f32 outputs.
        s1_ref[...] = jnp.sum(acc, axis=0, keepdims=True)[None]
        s2_ref[...] = jnp.sum(acc * acc, axis=0, keepdims=True)[None]


def pallas_matmul_stats(a, b):
    """(M,K) @ (K,N), bf16 operands, f32 accumulation.
    K and N must be multiples of 128 (channel-padded).  Returns
    (out bf16 (M,N), s1 f32 (Mt,1,N), s2 f32 (Mt,1,N))."""
    M, K = a.shape
    K2, N = b.shape
    assert K == K2 and K % LANE == 0 and N % LANE == 0

    tm = _pick_tile(M, 256, 8)
    tn = _pick_tile(N, 512, LANE)
    tk = _pick_tile(K, 8192, LANE)   # full K resident -> the k loop collapses
    # v7x megacore: keep >= 2 grid iterations on a parallel axis.  Prefer
    # splitting N (A is tiny; splitting M would re-read the big weight block).
    if N // tn < 2:
        tn = _split_for_two(N, tn, LANE)
    if N // tn < 2 and M // tm < 2:
        tm = _split_for_two(M, tm, 8)
    mt, nt, kt = M // tm, N // tn, K // tk

    flops = 2 * M * N * K
    bytes_accessed = (2 * M * K * nt        # A is re-read once per N tile
                      + 2 * K * N * mt      # B is re-read once per M tile
                      + 2 * M * N           # bf16 output
                      + 4 * 2 * mt * N)     # f32 stats
    out, s1, s2 = pl.pallas_call(
        _matmul_bn_stats_kernel,
        out_shape=(jax.ShapeDtypeStruct((M, N), jnp.bfloat16),
                   jax.ShapeDtypeStruct((mt, 1, N), jnp.float32),
                   jax.ShapeDtypeStruct((mt, 1, N), jnp.float32)),
        grid=(mt, nt, kt),
        in_specs=[pl.BlockSpec((tm, tk), lambda i, j, k: (i, k)),
                  pl.BlockSpec((tk, tn), lambda i, j, k: (k, j))],
        out_specs=(pl.BlockSpec((tm, tn), lambda i, j, k: (i, j)),
                   pl.BlockSpec((1, 1, tn), lambda i, j, k: (i, 0, j)),
                   pl.BlockSpec((1, 1, tn), lambda i, j, k: (i, 0, j))),
        scratch_shapes=[pltpu.VMEM((tm, tn), jnp.float32)],
        compiler_params=_cparams("parallel", "parallel", "arbitrary"),
        cost_estimate=pl.CostEstimate(flops=flops, transcendentals=0,
                                      bytes_accessed=bytes_accessed),
    )(a, b)
    return out, s1, s2


# --------------------------------------------------------------------------
# Tiled BatchNorm apply (+ optional residual add) + ReLU
# --------------------------------------------------------------------------
def _bn_apply_kernel(x_ref, s_ref, b_ref, o_ref, *, relu):
    y = x_ref[...].astype(jnp.float32) * s_ref[...] + b_ref[...]
    if relu:
        y = jnp.maximum(y, 0.0)
    o_ref[...] = y.astype(o_ref.dtype)


def _bn_apply_add_relu_kernel(x_ref, s_ref, b_ref, r_ref, o_ref):
    y = (x_ref[...].astype(jnp.float32) * s_ref[...] + b_ref[...]
         + r_ref[...].astype(jnp.float32))
    o_ref[...] = jnp.maximum(y, 0.0).astype(o_ref.dtype)


def _bn_scale_bias(s1, s2, gamma, beta, m):
    """Training-mode BN over the full N*H*W axis from the fused per-tile sums
    ((Mt,1,C) -> (C,) plain-JAX reduction — negligible vs. a full pass).
    NOTE: E[x^2]-E[x]^2 in f32 can cancel for pathological activations; fine
    for this init/input (a Welford reduction would be safer in general)."""
    s1 = jnp.sum(s1, axis=(0, 1))
    s2 = jnp.sum(s2, axis=(0, 1))
    mean = s1 / m
    var = jnp.maximum(s2 / m - mean * mean, 0.0)
    scale = gamma * jax.lax.rsqrt(var + EPS)    # pad channels: gamma=0 -> 0
    bias = beta - mean * scale
    return scale.reshape(1, -1), bias.reshape(1, -1)


def pallas_bn_apply(x2d, scale, bias, relu, residual2d=None):
    M, C = x2d.shape
    tm = _pick_tile(M, 1024, 8)
    tn = _pick_tile(C, 512, LANE)
    # Keep >= 2 grid iterations on a parallel axis (v7x megacore).
    if M // tm < 2 and C // tn < 2:
        tm2 = _split_for_two(M, tm, 8)
        if M // tm2 >= 2:
            tm = tm2
        else:
            tn = _split_for_two(C, tn, LANE)
    x_spec = pl.BlockSpec((tm, tn), lambda i, j: (i, j))
    v_spec = pl.BlockSpec((1, tn), lambda i, j: (0, j))
    if residual2d is None:
        kernel = functools.partial(_bn_apply_kernel, relu=relu)
        in_specs = [x_spec, v_spec, v_spec]
        args = (x2d, scale, bias)
    else:
        kernel = _bn_apply_add_relu_kernel
        in_specs = [x_spec, v_spec, v_spec, x_spec]
        args = (x2d, scale, bias, residual2d)
    return pl.pallas_call(
        kernel,
        out_shape=jax.ShapeDtypeStruct((M, C), jnp.bfloat16),
        grid=(M // tm, C // tn),
        in_specs=in_specs,
        out_specs=x_spec,
        compiler_params=_cparams("parallel", "parallel"),
    )(*args)


# --------------------------------------------------------------------------
# Pooling kernels
# --------------------------------------------------------------------------
def _maxpool_dense_kernel(x_ref, o_ref):
    """x_ref: (1, H+2, W+2, C) zero-padded (post-ReLU, so 0-pad is exact for
    max); o_ref: (1, H, W, C) dense stride-1 3x3 running max.  The 9 taps are
    shifted in-VMEM slices of the single DMA'd block — no HBM tap slabs."""
    hd, wd = o_ref.shape[1], o_ref.shape[2]
    m = x_ref[:, 0:hd, 0:wd, :].astype(jnp.float32)
    for i in range(3):
        for j in range(3):
            if i == 0 and j == 0:
                continue
            m = jnp.maximum(m, x_ref[:, i:i + hd, j:j + wd, :].astype(jnp.float32))
    o_ref[...] = m.astype(o_ref.dtype)


def _mean_kernel(x_ref, o_ref):
    o_ref[...] = jnp.mean(x_ref[...].astype(jnp.float32), axis=1)


def maxpool2d_3x3_s2_p1(x):
    """x: (N,H,W,C) bf16, post-ReLU.  Dense 3x3 max in Pallas, stride-2
    subsample as a tiny wrapper-side slice."""
    N, H, W, C = x.shape
    xp = jnp.pad(x, ((0, 0), (1, 1), (1, 1), (0, 0)))     # zeros (exact: x>=0)
    Ho = (H + 2 - 3) // 2 + 1
    Wo = (W + 2 - 3) // 2 + 1
    dense = pl.pallas_call(
        _maxpool_dense_kernel,
        out_shape=jax.ShapeDtypeStruct((N, H, W, C), jnp.bfloat16),
        grid=(N,),
        in_specs=[pl.BlockSpec((1, H + 2, W + 2, C), lambda n: (n, 0, 0, 0))],
        out_specs=pl.BlockSpec((1, H, W, C), lambda n: (n, 0, 0, 0)),
        compiler_params=_cparams("parallel"),
    )(xp)
    return dense[:, :2 * Ho:2, :2 * Wo:2, :]


def global_avgpool(x):
    N, H, W, C = x.shape
    tn = _pick_tile(C, 512, LANE)
    return pl.pallas_call(
        _mean_kernel,
        out_shape=jax.ShapeDtypeStruct((N, C), jnp.float32),
        grid=(C // tn,),
        in_specs=[pl.BlockSpec((N, H * W, tn), lambda j: (0, 0, j))],
        out_specs=pl.BlockSpec((N, tn), lambda j: (0, j)),
        compiler_params=_cparams("parallel"),
    )(x.reshape(N, H * W, C))


# --------------------------------------------------------------------------
# Conv wrappers (patch glue in plain JAX, compute in Pallas)
# --------------------------------------------------------------------------
def _extract_patches(x, kh, kw, stride, pad, pad_value):
    N, H, W, C = x.shape
    xp = jnp.pad(x, ((0, 0), (pad, pad), (pad, pad), (0, 0)),
                 constant_values=pad_value)
    Ho = (H + 2 * pad - kh) // stride + 1
    Wo = (W + 2 * pad - kw) // stride + 1
    cols = []
    for i in range(kh):
        for j in range(kw):
            cols.append(
                xp[:, i:i + stride * Ho:stride, j:j + stride * Wo:stride, :])
    return cols, (N, Ho, Wo)


def conv2d(x, w, stride, pad):
    """x: (N,H,W,Cin_padded), w: (KH,KW,Cin_padded,Cout_padded) bf16, bias-free.
    Returns (y2d bf16 (M,Cout), s1 f32 (Mt,1,Cout), s2 f32 (Mt,1,Cout), shape)."""
    KH, KW, Cin, Cout = w.shape
    xb = x.astype(jnp.bfloat16)
    if KH == 1 and KW == 1:
        # 1x1 conv: no im2col, just a (strided) reshape.
        if stride != 1:
            xb = xb[:, ::stride, ::stride, :]
        N, Ho, Wo, _ = xb.shape
        a = xb.reshape(N * Ho * Wo, Cin)
    else:
        # TODO(synk): im2col slab (bf16, channel-padded) still materialized;
        # tap-as-grid-axis direct conv would remove this HBM round trip.
        cols, (N, Ho, Wo) = _extract_patches(xb, KH, KW, stride, pad, 0.0)
        a = jnp.stack(cols, axis=3).reshape(N * Ho * Wo, KH * KW * Cin)
    b = w.reshape(KH * KW * Cin, Cout)
    # Lane-align the reduction axis (only triggers for the stem, K=147 -> 256).
    K = a.shape[1]
    Kp = _round_up(K, LANE)
    if Kp != K:
        a = jnp.pad(a, ((0, 0), (0, Kp - K)))
        b = jnp.pad(b, ((0, Kp - K), (0, 0)))
    y2d, s1, s2 = pallas_matmul_stats(a, b)
    return y2d, s1, s2, (N, Ho, Wo, Cout)


# --------------------------------------------------------------------------
# Deterministic parameter construction (ResNet-50 backbone, no checkpoint)
# Channel axes are zero-padded to multiples of 128 at init time.
# --------------------------------------------------------------------------
def _cp(c):
    return _round_up(c, LANE)


def _conv_w(key, kh, kw, cin, cout, cin_pad, cout_pad):
    fan_out = kh * kw * cout
    std = (2.0 / fan_out) ** 0.5
    w = jax.random.normal(key, (kh, kw, cin, cout), jnp.float32) * std
    w = jnp.pad(w, ((0, 0), (0, 0), (0, cin_pad - cin), (0, cout_pad - cout)))
    return w.astype(jnp.bfloat16)          # pre-cast: no per-forward weight cast


def _bn_params(c, c_pad):
    # torch default init: gamma = 1, beta = 0.  Pad channels get gamma = 0 so
    # they stay exactly zero through BN.
    gamma = jnp.pad(jnp.ones((c,), jnp.float32), (0, c_pad - c))
    beta = jnp.zeros((c_pad,), jnp.float32)
    return gamma, beta


def init_resnet50_params(key):
    keys = iter(jax.random.split(key, 256))
    params = {
        "conv1": _conv_w(next(keys), 7, 7, 3, 64, 3, _cp(64)),
        "bn1": _bn_params(64, _cp(64)),
    }
    layer_cfg = [(64, 3, 1), (128, 4, 2), (256, 6, 2), (512, 3, 2)]
    inplanes = 64
    layers = []
    for planes, nblocks, stride in layer_cfg:
        blocks = []
        for b in range(nblocks):
            blk = {
                "stride": stride if b == 0 else 1,
                "conv1": _conv_w(next(keys), 1, 1, inplanes, planes,
                                 _cp(inplanes), _cp(planes)),
                "bn1": _bn_params(planes, _cp(planes)),
                "conv2": _conv_w(next(keys), 3, 3, planes, planes,
                                 _cp(planes), _cp(planes)),
                "bn2": _bn_params(planes, _cp(planes)),
                "conv3": _conv_w(next(keys), 1, 1, planes, planes * 4,
                                 _cp(planes), _cp(planes * 4)),
                "bn3": _bn_params(planes * 4, _cp(planes * 4)),
            }
            if b == 0:
                blk["downsample_conv"] = _conv_w(next(keys), 1, 1,
                                                 inplanes, planes * 4,
                                                 _cp(inplanes), _cp(planes * 4))
                blk["downsample_bn"] = _bn_params(planes * 4, _cp(planes * 4))
            blocks.append(blk)
            inplanes = planes * 4
        layers.append(blocks)
    params["layers"] = layers
    # TODO(synk): fc0/fc1 of ResNet50_reduced are dead code (early `return x`),
    # so they are intentionally not materialized.
    return params


# --------------------------------------------------------------------------
# Forward pass  ==  ResNet50_reduced.forward
# --------------------------------------------------------------------------
def conv_bn(x, w, gamma, beta, stride, pad, relu):
    y2d, s1, s2, shape = conv2d(x, w, stride, pad)
    m = shape[0] * shape[1] * shape[2]
    scale, bias = _bn_scale_bias(s1, s2, gamma, beta, m)
    return pallas_bn_apply(y2d, scale, bias, relu=relu).reshape(shape)


def bottleneck(x, blk):
    identity = x
    out = conv_bn(x, blk["conv1"], *blk["bn1"], 1, 0, relu=True)
    out = conv_bn(out, blk["conv2"], *blk["bn2"], blk["stride"], 1, relu=True)

    y2d, s1, s2, shape = conv2d(out, blk["conv3"], 1, 0)
    m = shape[0] * shape[1] * shape[2]
    scale, bias = _bn_scale_bias(s1, s2, *blk["bn3"], m)

    if "downsample_conv" in blk:
        identity = conv_bn(x, blk["downsample_conv"], *blk["downsample_bn"],
                           blk["stride"], 0, relu=False)
    res2d = identity.reshape(m, shape[3]).astype(jnp.bfloat16)
    out2d = pallas_bn_apply(y2d, scale, bias, relu=True, residual2d=res2d)
    return out2d.reshape(shape)


def resnet50_reduced_forward(params, x_nchw):
    # NCHW (PyTorch) -> NHWC so channels sit on the 128-lane axis.
    x = jnp.transpose(x_nchw, (0, 2, 3, 1)).astype(jnp.float32)

    # stem: conv7x7 s2 p3 -> BN -> ReLU -> maxpool3x3 s2 p1
    x = conv_bn(x, params["conv1"], *params["bn1"], 2, 3, relu=True)
    x = maxpool2d_3x3_s2_p1(x)

    # layer1..layer4
    for blocks in params["layers"]:
        for blk in blocks:
            x = bottleneck(x, blk)

    # AdaptiveAvgPool2d((1,1)) + view(B, -1) -> (B, 2048) f32
    # (layer4 output channels are exactly 2048 — no padding to strip.)
    return global_avgpool(x)


# --------------------------------------------------------------------------
if __name__ == "__main__":
    key = jax.random.PRNGKey(0)
    pkey, xkey = jax.random.split(key)

    params = init_resnet50_params(pkey)

    # Small deterministic input consistent with the module: NCHW, 3 channels.
    x = jax.random.normal(xkey, (2, 3, 32, 32), jnp.float32)

    feats = resnet50_reduced_forward(params, x)
    feats = jax.block_until_ready(feats)

    assert feats.shape == (2, 2048), feats.shape
    assert bool(jnp.all(jnp.isfinite(feats)))
    print("KERNEL_OK")
</pallas_src>

<mosaic_0001>
module attributes {stable_mosaic.version = 11 : i64} {
  func.func @_matmul_bn_stats_kernel(%arg0: i32, %arg1: i32, %arg2: i32, %arg3: memref<256x256xbf16, #tpu.memory_space<vmem>>, %arg4: memref<256x128xbf16, #tpu.memory_space<vmem>>, %arg5: memref<256x128xbf16, #tpu.memory_space<vmem>>, %arg6: memref<1x1x128xf32, #tpu.memory_space<vmem>>, %arg7: memref<1x1x128xf32, #tpu.memory_space<vmem>>, %arg8: memref<256x128xf32, #tpu.memory_space<vmem>>) attributes {dimension_semantics = [#tpu.dimension_semantics<parallel>, #tpu.dimension_semantics<parallel>, #tpu.dimension_semantics<arbitrary>], iteration_bounds = array<i64: 2, 1, 1>, scalar_prefetch = 0 : i64, scratch_operands = 1 : i64, tpu.core_type = #tpu.core_type<tc>, window_params = [{transform_indices = @transform_0, window_bounds = array<i64: 256, 256>}, {transform_indices = @transform_1, window_bounds = array<i64: 256, 128>}, {transform_indices = @transform_2, window_bounds = array<i64: 256, 128>}, {transform_indices = @transform_3, window_bounds = array<i64: 1, 1, 128>}, {transform_indices = @transform_4, window_bounds = array<i64: 1, 1, 128>}]} {
    %c0_i32 = arith.constant 0 : i32
    %0 = arith.cmpi eq, %arg2, %c0_i32 : i32
    %1 = arith.extui %0 : i1 to i32
    %c0_i32_0 = arith.constant 0 : i32
    %2 = arith.cmpi ne, %1, %c0_i32_0 : i32
    scf.if %2 {
      %cst_10 = arith.constant 0.000000e+00 : f32
      %12 = vector.broadcast %cst_10 : f32 to vector<256x128xf32>
      %c0_11 = arith.constant 0 : index
      %c0_12 = arith.constant 0 : index
      %13 = vector.load %arg8[%c0_11, %c0_12] : memref<256x128xf32, #tpu.memory_space<vmem>>, vector<256x128xf32>
      tpu.vector_store %arg8[%c0_11, %c0_12], %12 {strides = array<i32>} : memref<256x128xf32, #tpu.memory_space<vmem>>, vector<256x128xf32>,
    } else {
    }
    %c0 = arith.constant 0 : index
    %c0_1 = arith.constant 0 : index
    %3 = vector.load %arg8[%c0, %c0_1] : memref<256x128xf32, #tpu.memory_space<vmem>>, vector<256x128xf32>
    %c0_2 = arith.constant 0 : index
    %c0_3 = arith.constant 0 : index
    %4 = vector.load %arg3[%c0_2, %c0_3] : memref<256x256xbf16, #tpu.memory_space<vmem>>, vector<256x256xbf16>
    %c0_4 = arith.constant 0 : index
    %c0_5 = arith.constant 0 : index
    %5 = vector.load %arg4[%c0_4, %c0_5] : memref<256x128xbf16, #tpu.memory_space<vmem>>, vector<256x128xbf16>
    %cst = arith.constant dense<0.000000e+00> : vector<256x128xf32>
    %6 = tpu.matmul %4, %5, %cst {dimension_numbers = #tpu.dot_dimension_numbers<[1], [0], [0], [1], [0, 0, 1, 1], [], []>} : vector<256x256xbf16>, vector<256x128xbf16>, vector<256x128xf32> -> vector<256x128xf32>
    %7 = arith.addf %3, %6 : vector<256x128xf32>
    %c0_6 = arith.constant 0 : index
    %c0_7 = arith.constant 0 : index
    %8 = vector.load %arg8[%c0_6, %c0_7] : memref<256x128xf32, #tpu.memory_space<vmem>>, vector<256x128xf32>
    tpu.vector_store %arg8[%c0_6, %c0_7], %7 {strides = array<i32>} : memref<256x128xf32, #tpu.memory_space<vmem>>, vector<256x128xf32>,
    %c0_i32_8 = arith.constant 0 : i32
    %9 = arith.cmpi eq, %arg2, %c0_i32_8 : i32
    %10 = arith.extui %9 : i1 to i32
    %c0_i32_9 = arith.constant 0 : i32
    %11 = arith.cmpi ne, %10, %c0_i32_9 : i32
    scf.if %11 {
      %c0_10 = arith.constant 0 : index
      %c0_11 = arith.constant 0 : index
      %12 = vector.load %arg8[%c0_10, %c0_11] : memref<256x128xf32, #tpu.memory_space<vmem>>, vector<256x128xf32>
      %13 = arith.truncf %12 : vector<256x128xf32> to vector<256x128xbf16>
      %c0_12 = arith.constant 0 : index
      %c0_13 = arith.constant 0 : index
      %14 = vector.load %arg5[%c0_12, %c0_13] : memref<256x128xbf16, #tpu.memory_space<vmem>>, vector<256x128xbf16>
      tpu.vector_store %arg5[%c0_12, %c0_13], %13 {strides = array<i32>} : memref<256x128xbf16, #tpu.memory_space<vmem>>, vector<256x128xbf16>,
      %cst_14 = arith.constant dense<0.000000e+00> : vector<128xf32>
      %15 = vector.multi_reduction <add>, %12, %cst_14 [0] : vector<256x128xf32> to vector<128xf32>
      %16 = vector.shape_cast %15 : vector<128xf32> to vector<1x128xf32>
      %17 = vector.shape_cast %16 : vector<1x128xf32> to vector<1x1x128xf32>
      %c0_15 = arith.constant 0 : index
      %c0_16 = arith.constant 0 : index
      %c0_17 = arith.constant 0 : index
      %18 = vector.load %arg6[%c0_15, %c0_16, %c0_17] : memref<1x1x128xf32, #tpu.memory_space<vmem>>, vector<1x1x128xf32>
      tpu.vector_store %arg6[%c0_15, %c0_16, %c0_17], %17 {strides = array<i32>} : memref<1x1x128xf32, #tpu.memory_space<vmem>>, vector<1x1x128xf32>,
      %19 = arith.mulf %12, %12 : vector<256x128xf32>
      %cst_18 = arith.constant dense<0.000000e+00> : vector<128xf32>
      %20 = vector.multi_reduction <add>, %19, %cst_18 [0] : vector<256x128xf32> to vector<128xf32>
      %21 = vector.shape_cast %20 : vector<128xf32> to vector<1x128xf32>
      %22 = vector.shape_cast %21 : vector<1x128xf32> to vector<1x1x128xf32>
      %c0_19 = arith.constant 0 : index
      %c0_20 = arith.constant 0 : index
      %c0_21 = arith.constant 0 : index
      %23 = vector.load %arg7[%c0_19, %c0_20, %c0_21] : memref<1x1x128xf32, #tpu.memory_space<vmem>>, vector<1x1x128xf32>
      tpu.vector_store %arg7[%c0_19, %c0_20, %c0_21], %22 {strides = array<i32>} : memref<1x1x128xf32, #tpu.memory_space<vmem>>, vector<1x1x128xf32>,
    } else {
    }
    return
  }
  func.func @transform_0(%arg0: i32, %arg1: i32, %arg2: i32) -> (i32, i32) {
    %c0_i32 = arith.constant 0 : i32
    return %arg0, %arg2 : i32, i32
  }
  func.func @transform_1(%arg0: i32, %arg1: i32, %arg2: i32) -> (i32, i32) {
    %c0_i32 = arith.constant 0 : i32
    return %arg2, %arg1 : i32, i32
  }
  func.func @transform_2(%arg0: i32, %arg1: i32, %arg2: i32) -> (i32, i32) {
    %c0_i32 = arith.constant 0 : i32
    return %arg0, %arg1 : i32, i32
  }
  func.func @transform_3(%arg0: i32, %arg1: i32, %arg2: i32) -> (i32, i32, i32) {
    %c0_i32 = arith.constant 0 : i32
    %c0_i32_0 = arith.constant 0 : i32
    return %arg0, %c0_i32, %arg1 : i32, i32, i32
  }
  func.func @transform_4(%arg0: i32, %arg1: i32, %arg2: i32) -> (i32, i32, i32) {
    %c0_i32 = arith.constant 0 : i32
    %c0_i32_0 = arith.constant 0 : i32
    return %arg0, %c0_i32, %arg1 : i32, i32, i32
  }
}

</mosaic_0001>

<llo_original>
// kernel: tpu_custom_call.1
$region0: #{tpu_custom_call.1}
  #allocation0 [shape = 'u32[]', space=smem, size = 0x4, offset = 0x4, fixed_abs, tag = 'smem constant byte address 0x4 - core index']
  #allocation1 [shape = 'u32[144,128]{1,0:T(1,128)}', space=vmem, size = 0x12000, scoped, tag = 'internal scratch']
  #allocation2 [shape = 'f32[256,128]{1,0:T(8,128)}', space=vmem, size = 0x20000, scoped, tag = 'scratch operand']
  %s0 = inlined_call_operand.hbm [shape: bf16[512,256], index: 0, kind: input, shape index: {}]
  %s1 = inlined_call_operand.hbm [shape: bf16[256,128], index: 1, kind: input, shape index: {}]
  %s2 = inlined_call_operand.hbm [shape: bf16[512,128], index: 2, kind: output, shape index: {0}]
  %s3 = inlined_call_operand.hbm [shape: f32[2,1,128], index: 3, kind: output, shape index: {1}]
  %s4 = inlined_call_operand.hbm [shape: f32[2,1,128], index: 4, kind: output, shape index: {2}]
  %5 = xla_tuple %s2, %s3, %s4
  %s6 = sld [smem:[#allocation0]]
  $region73: #{tpu_custom_call.1} parent=0
    _
  %s8 = ssub.s32 1, %s6
  %s9 = scalar_select 0, %s8, %s6
  $region1: #{tpu_custom_call.1} parent=0
    #allocation3 [shape = 'u8[262144]{0}', space=vmem, size = 0x40000, scoped, tag = 'input window, operand 0']
    #allocation4 [shape = 's32[2]{0}', space=sflag, size = 0x8, scoped, tag = 'scoped memory for tpu_custom_call.1']
    #allocation5 [shape = 's32[2]{0}', space=sflag, size = 0x8, scoped, tag = 'scoped memory for tpu_custom_call.1']
    #allocation6 [shape = 'u8[65536]{0}', space=vmem, size = 0x10000, scoped, tag = 'input window, operand 1, single buffered']
    #allocation7 [shape = 's32[1]{0}', space=sflag, size = 0x4, scoped, tag = 'scoped memory for tpu_custom_call.1']
    #allocation8 [shape = 'u8[131072]{0}', space=vmem, size = 0x20000, scoped, tag = 'output window, operand 0']
    #allocation9 [shape = 'u8[1024]{0}', space=vmem, size = 0x400, scoped, tag = 'output window, operand 1']
    #allocation10 [shape = 's32[2]{0}', space=sflag, size = 0x8, scoped, tag = 'scoped memory for tpu_custom_call.1']
    #allocation11 [shape = 'u8[1024]{0}', space=vmem, size = 0x400, scoped, tag = 'output window, operand 2']
    %10 = vsyncpa [#allocation4], 0
    %s11 = scalar_lea.sflag [#allocation4], 1
    %12 = vsyncpa %s11, 0
    %13 = vsyncpa [#allocation7], 0
    %14 = vsyncpa [#allocation5], 0
    %s15 = scalar_lea.sflag [#allocation5], 1
    %16 = vsyncpa %s15, 0
    %17 = vsyncpa [#allocation10], 0
    %s18 = scalar_lea.sflag [#allocation10], 1
    %19 = vsyncpa %s18, 0
    loop: start=0, step=1, limit=4
    $region2: #{tpu_custom_call.1} parent=1 // loop_pre_header
      _
    $region3: #{tpu_custom_call.1} parent=1 // loop_header
      %s21 = sphi 0, %s25
      %p22 = scmp.ge.s32.totalorder %s21, 4
      %s28 = sphi 0, %s47
      %s29 = sphi 0, %s43
      %s30 = sphi 0, %s39
      %s31 = sphi 0, %s28
      %s32 = sphi 0, %s29
      %s33 = sphi 0, %s30
      %s34 = sphi 0, %s31
      %s35 = sphi 0, %s32
      %s36 = sphi 0, %s33
      %s52 = sphi 0, %s54
      %s55 = sphi 0, %s52
      %s56 = sphi 0, %s55
      %s72 = sphi 0, %s56
      %s80 = sphi 0, %s82
      %s83 = sphi 0, %s80
      %s84 = sphi 0, %s83
      %s100 = sphi 0, %s84
      %s108 = sphi 0, %s110
      %s111 = sphi 0, %s108
      %s112 = sphi 0, %s111
      %s128 = sphi 0, %s112
      %s136 = sphi 0, %s138
      %s139 = sphi 0, %s136
      %s140 = sphi 0, %s139
      %s156 = sphi 0, %s140
      %s164 = sphi 0, %s166
      %s167 = sphi 0, %s164
      %s168 = sphi 0, %s167
      %s184 = sphi 0, %s168
    $region4: #{tpu_custom_call.1} parent=1 // loop_header_branch
      %24 = sbr.rel (%p22) target = $region8
    $region5: #{tpu_custom_call.1} parent=1 // loop_body
      %s26 = ssub.s32 %s21, 1
      %s27 = ssub.s32 %s21, 2
      %s37 = sadd.s32 1, %s30
      %p38 = scmp.ge.s32.totalorder %s37, 1
      %s39 = scalar_select %p38, 0, %s37
      %s40 = sadd.s32 1, %s29
      %s41 = scalar_select %p38, %s40, %s29
      %p42 = scmp.ge.s32.totalorder %s41, 1
      %s43 = scalar_select %p42, 0, %s41
      %s44 = sadd.s32 1, %s28
      %s45 = scalar_select %p42, %s44, %s28
      %p46 = scmp.ge.s32.totalorder %s45, 2
      %s47 = scalar_select %p46, 0, %s45
      %s48 = ssub.s32 %s28, %s47
      %s49 = ssub.s32 %s30, %s39
      %s50 = sor.u32 %s48, %s49
      %p51 = scmp.eq.s32.totalorder %s50, 0
      %s53 = sadd.s32 %s52, 1
      %s54 = scalar_select %p51, %s52, %s53
      %p57 = pneg %p51
      %p58 = scmp.eq.s32.totalorder %s21, 1
      %p59 = por %p57, %p58
      %p60 = scmp.ne.s32.totalorder %s52, %s55
      %p61 = scmp.eq.s32.totalorder %s21, 0
      %p62 = por %p60, %p61
      %p63 = scmp.ne.s32.totalorder %s52, %s55
      %p64 = scmp.eq.s32.totalorder %s26, 1
      %p65 = por %p63, %p64
      %p66 = scmp.ne.s32.totalorder %s55, %s56
      %p67 = scmp.eq.s32.totalorder %s26, 0
      %p68 = por %p66, %p67
      %p69 = scmp.ne.s32.totalorder %s55, %s56
      %p70 = scmp.eq.s32.totalorder %s27, 1
      %p71 = por %p69, %p70
      %p73 = scmp.ne.s32.totalorder %s56, %s72
      %p74 = scmp.eq.s32.totalorder %s27, 0
      %p75 = por %p73, %p74
      %s76 = ssub.s32 %s30, %s39
      %s77 = ssub.s32 %s29, %s43
      %s78 = sor.u32 %s76, %s77
      %p79 = scmp.eq.s32.totalorder %s78, 0
      %s81 = sadd.s32 %s80, 1
      %s82 = scalar_select %p79, %s80, %s81
      %p85 = pneg %p79
      %p86 = scmp.eq.s32.totalorder %s21, 1
      %p87 = por %p85, %p86
      %p88 = scmp.ne.s32.totalorder %s80, %s83
      %p89 = scmp.eq.s32.totalorder %s21, 0
      %p90 = por %p88, %p89
      %p91 = scmp.ne.s32.totalorder %s80, %s83
      %p92 = scmp.eq.s32.totalorder %s26, 1
      %p93 = por %p91, %p92
      %p94 = scmp.ne.s32.totalorder %s83, %s84
      %p95 = scmp.eq.s32.totalorder %s26, 0
      %p96 = por %p94, %p95
      %p97 = scmp.ne.s32.totalorder %s83, %s84
      %p98 = scmp.eq.s32.totalorder %s27, 1
      %p99 = por %p97, %p98
      %p101 = scmp.ne.s32.totalorder %s84, %s100
      %p102 = scmp.eq.s32.totalorder %s27, 0
      %p103 = por %p101, %p102
      %s104 = ssub.s32 %s28, %s47
      %s105 = ssub.s32 %s29, %s43
      %s106 = sor.u32 %s104, %s105
      %p107 = scmp.eq.s32.totalorder %s106, 0
      %s109 = sadd.s32 %s108, 1
      %s110 = scalar_select %p107, %s108, %s109
      %p113 = pneg %p107
      %p114 = scmp.eq.s32.totalorder %s21, 1
      %p115 = por %p113, %p114
      %p116 = scmp.ne.s32.totalorder %s108, %s111
      %p117 = scmp.eq.s32.totalorder %s21, 0
      %p118 = por %p116, %p117
      %p119 = scmp.ne.s32.totalorder %s108, %s111
      %p120 = scmp.eq.s32.totalorder %s26, 1
      %p121 = por %p119, %p120
      %p122 = scmp.ne.s32.totalorder %s111, %s112
      %p123 = scmp.eq.s32.totalorder %s26, 0
      %p124 = por %p122, %p123
      %p125 = scmp.ne.s32.totalorder %s111, %s112
      %p126 = scmp.eq.s32.totalorder %s27, 1
      %p127 = por %p125, %p126
      %p129 = scmp.ne.s32.totalorder %s112, %s128
      %p130 = scmp.eq.s32.totalorder %s27, 0
      %p131 = por %p129, %p130
      %s132 = ssub.s32 %s28, %s47
      %s133 = ssub.s32 %s29, %s43
      %s134 = sor.u32 %s132, %s133
      %p135 = scmp.eq.s32.totalorder %s134, 0
      %s137 = sadd.s32 %s136, 1
      %s138 = scalar_select %p135, %s136, %s137
      %p141 = pneg %p135
      %p142 = scmp.eq.s32.totalorder %s21, 1
      %p143 = por %p141, %p142
      %p144 = scmp.ne.s32.totalorder %s136, %s139
      %p145 = scmp.eq.s32.totalorder %s21, 0
      %p146 = por %p144, %p145
      %p147 = scmp.ne.s32.totalorder %s136, %s139
      %p148 = scmp.eq.s32.totalorder %s26, 1
      %p149 = por %p147, %p148
      %p150 = scmp.ne.s32.totalorder %s139, %s140
      %p151 = scmp.eq.s32.totalorder %s26, 0
      %p152 = por %p150, %p151
      %p153 = scmp.ne.s32.totalorder %s139, %s140
      %p154 = scmp.eq.s32.totalorder %s27, 1
      %p155 = por %p153, %p154
      %p157 = scmp.ne.s32.totalorder %s140, %s156
      %p158 = scmp.eq.s32.totalorder %s27, 0
      %p159 = por %p157, %p158
      %s160 = ssub.s32 %s28, %s47
      %s161 = ssub.s32 %s29, %s43
      %s162 = sor.u32 %s160, %s161
      %p163 = scmp.eq.s32.totalorder %s162, 0
      %s165 = sadd.s32 %s164, 1
      %s166 = scalar_select %p163, %s164, %s165
      %p169 = pneg %p163
      %p170 = scmp.eq.s32.totalorder %s21, 1
      %p171 = por %p169, %p170
      %p172 = scmp.ne.s32.totalorder %s164, %s167
      %p173 = scmp.eq.s32.totalorder %s21, 0
      %p174 = por %p172, %p173
      %p175 = scmp.ne.s32.totalorder %s164, %s167
      %p176 = scmp.eq.s32.totalorder %s26, 1
      %p177 = por %p175, %p176
      %p178 = scmp.ne.s32.totalorder %s167, %s168
      %p179 = scmp.eq.s32.totalorder %s26, 0
      %p180 = por %p178, %p179
      %p181 = scmp.ne.s32.totalorder %s167, %s168
      %p182 = scmp.eq.s32.totalorder %s27, 1
      %p183 = por %p181, %p182
      %p185 = scmp.ne.s32.totalorder %s168, %s184
      %p186 = scmp.eq.s32.totalorder %s27, 0
      %p187 = por %p185, %p186
      %p188 = scmp.le.s32.totalorder 1, %s21
      %p189 = scmp.lt.s32.totalorder %s21, 3
      %p190 = pnand %p188, %p189
      %p191 = pneg %p190
      // Predicated region
      $region9: #{tpu_custom_call.1} parent=5 // pred_check
        _
      $region10: #{tpu_custom_call.1} parent=5 // pred_check_branch
        %193 = sbr.rel (%p190) target = $region12
      $region11: #{tpu_custom_call.1} parent=5 // pred_region
        %s194 = ssub.s32 %s21, 1
        // Predicated region
        $region13: #{tpu_custom_call.1} parent=11 // pred_check
          %p195 = pneg %p96
        $region14: #{tpu_custom_call.1} parent=11 // pred_check_branch
          %197 = sbr.rel (%p195) target = $region16
        $region15: #{tpu_custom_call.1} parent=11 // pred_region
          %s198 = smul.u32 32, %s33
          %s200 = ssub.s32 2048, 2048
          %201 = vsyncadd [#allocation7], %s200
          %s202 = sadd.s32 %s32, %s198
          %s203 = smul.addr %s202, 64
          %s204 = scalar_lea.hbm %s1, %s203
          %s205 = sshll.u32 [#allocation6], 4
          %s206 = int_to_ptr.vmem [resolvable:$true] %s205
          %211 = dma.hbm_to_vmem [thread:$0]  %s204, 2048, %s206, [#allocation7], 64, 64, 4
        $region16: #{tpu_custom_call.1} parent=11 // pred_fallthru
          _
      $region12: #{tpu_custom_call.1} parent=5 // pred_fallthru
        _
      %p212 = scmp.lt.s32.totalorder %s21, 2
      // Predicated region
      $region17: #{tpu_custom_call.1} parent=5 // pred_check
        %p213 = pneg %p212
      $region18: #{tpu_custom_call.1} parent=5 // pred_check_branch
        %215 = sbr.rel (%p213) target = $region20
      $region19: #{tpu_custom_call.1} parent=5 // pred_region
        // Predicated region
        $region21: #{tpu_custom_call.1} parent=19 // pred_check
          %p216 = pneg %p62
        $region22: #{tpu_custom_call.1} parent=19 // pred_check_branch
          %218 = sbr.rel (%p216) target = $region24
        $region23: #{tpu_custom_call.1} parent=19 // pred_region
          %s219 = sand.u32 %s52, 1
          %s220 = scalar_lea.sflag [#allocation4], %s219
          %s221 = sand.u32 %s52, 1
          %s222 = smul.addr %s221, 256
          %s223 = scalar_lea.vmem [#allocation3], %s222
          %s224 = smul.u32 32, %s28
          %s225 = smul.u32 2, %s30
          %s227 = ssub.s32 4096, 4096
          %228 = vsyncadd %s220, %s227
          %s229 = smul.addr %s224, 2
          %s230 = sadd.s32 %s225, %s229
          %s231 = smul.addr %s230, 64
          %s232 = scalar_lea.hbm %s0, %s231
          %s233 = sshll.u32 %s223, 4
          %s234 = int_to_ptr.vmem [resolvable:$true] %s233
          %239 = dma.hbm_to_vmem [thread:$0]  %s232, 4096, %s234, %s220, 128, 128, 8
        $region24: #{tpu_custom_call.1} parent=19 // pred_fallthru
          _
      $region20: #{tpu_custom_call.1} parent=5 // pred_fallthru
        _
      %p240 = scmp.le.s32.totalorder 1, %s21
      %p241 = scmp.lt.s32.totalorder %s21, 3
      %p242 = pnand %p240, %p241
      %p243 = pneg %p242
      // Predicated region
      $region25: #{tpu_custom_call.1} parent=5 // pred_check
        _
      $region26: #{tpu_custom_call.1} parent=5 // pred_check_branch
        %245 = sbr.rel (%p242) target = $region28
      $region27: #{tpu_custom_call.1} parent=5 // pred_region
        %s246 = ssub.s32 %s21, 1
        %s247 = sand.u32 %s55, 1
        %s248 = scalar_lea.sflag [#allocation4], %s247
        %s249 = sand.u32 %s55, 1
        %s250 = smul.addr %s249, 256
        %s251 = scalar_lea.vmem [#allocation3], %s250
        // Predicated region
        $region29: #{tpu_custom_call.1} parent=27 // pred_check
          %p252 = pneg %p68
        $region30: #{tpu_custom_call.1} parent=27 // pred_check_branch
          %254 = sbr.rel (%p252) target = $region32
        $region31: #{tpu_custom_call.1} parent=27 // pred_region
          %255 = dma.done %s248, 4096
        $region32: #{tpu_custom_call.1} parent=27 // pred_fallthru
          _
        // Predicated region
        $region33: #{tpu_custom_call.1} parent=27 // pred_check
          %p256 = pneg %p96
        $region34: #{tpu_custom_call.1} parent=27 // pred_check_branch
          %258 = sbr.rel (%p256) target = $region36
        $region35: #{tpu_custom_call.1} parent=27 // pred_region
          %259 = dma.done [#allocation7], 2048
        $region36: #{tpu_custom_call.1} parent=27 // pred_fallthru
          _
        %s260 = sand.u32 %s55, 1
        %s261 = scalar_lea.sflag [#allocation4], %s260
        %s262 = sand.u32 %s55, 1
        %s263 = smul.addr %s262, 256
        %s264 = scalar_lea.vmem [#allocation3], %s263
        %p265 = pneg %p68
        %p266 = pneg %p65
        %p267 = pneg %p96
        %p268 = pneg %p93
        %p269 = pneg %p124
        %p270 = pneg %p121
        %s271 = sand.u32 %s111, 1
        %s272 = scalar_lea.sflag [#allocation5], %s271
        %s273 = sand.u32 %s111, 1
        %s274 = smul.addr %s273, 128
        %s275 = scalar_lea.vmem [#allocation8], %s274
        %p276 = pneg %p152
        %p277 = pneg %p149
        %s278 = sand.u32 %s26, 1
        %s279 = scalar_lea.sflag [#allocation10], %s278
        %s280 = sand.u32 %s139, 1
        %s281 = scalar_lea.vmem [#allocation9], %s280
        %p282 = pneg %p180
        %p283 = pneg %p177
        %s284 = sand.u32 %s26, 1
        %s285 = scalar_lea.sflag [#allocation10], %s284
        %s286 = sand.u32 %s167, 1
        %s287 = scalar_lea.vmem [#allocation11], %s286
        %s288 = smul.u32 32, %s31
        %s289 = smul.u32 2, %s33
        %s290 = smul.u32 32, %s33
        %s291 = smul.u32 32, %s31
        %p293 = scmp.eq.s32.totalorder %s33, 0
        // Predicated region
        $region37: #{tpu_custom_call.1} parent=27 // pred_check
          %p294 = pneg %p293
        $region38: #{tpu_custom_call.1} parent=27 // pred_check_branch
          %296 = sbr.rel (%p294) target = $region40
        $region39: #{tpu_custom_call.1} parent=27 // pred_region
          %297 = vst [vmem:[#allocation2] sm:$0xff] 0.0
          %298 = vst [vmem:[#allocation2 + $0x8] sm:$0xff] 0.0
          %299 = vst [vmem:[#allocation2 + $0x10] sm:$0xff] 0.0
          %300 = vst [vmem:[#allocation2 + $0x18] sm:$0xff] 0.0
          %301 = vst [vmem:[#allocation2 + $0x20] sm:$0xff] 0.0
          %302 = vst [vmem:[#allocation2 + $0x28] sm:$0xff] 0.0
          %303 = vst [vmem:[#allocation2 + $0x30] sm:$0xff] 0.0
          %304 = vst [vmem:[#allocation2 + $0x38] sm:$0xff] 0.0
          %305 = vst [vmem:[#allocation2 + $0x40] sm:$0xff] 0.0
          %306 = vst [vmem:[#allocation2 + $0x48] sm:$0xff] 0.0
          %307 = vst [vmem:[#allocation2 + $0x50] sm:$0xff] 0.0
          %308 = vst [vmem:[#allocation2 + $0x58] sm:$0xff] 0.0
          %309 = vst [vmem:[#allocation2 + $0x60] sm:$0xff] 0.0
          %310 = vst [vmem:[#allocation2 + $0x68] sm:$0xff] 0.0
          %311 = vst [vmem:[#allocation2 + $0x70] sm:$0xff] 0.0
          %312 = vst [vmem:[#allocation2 + $0x78] sm:$0xff] 0.0
          %313 = vst [vmem:[#allocation2 + $0x80] sm:$0xff] 0.0
          %314 = vst [vmem:[#allocation2 + $0x88] sm:$0xff] 0.0
          %315 = vst [vmem:[#allocation2 + $0x90] sm:$0xff] 0.0
          %316 = vst [vmem:[#allocation2 + $0x98] sm:$0xff] 0.0
          %317 = vst [vmem:[#allocation2 + $0xa0] sm:$0xff] 0.0
          %318 = vst [vmem:[#allocation2 + $0xa8] sm:$0xff] 0.0
          %319 = vst [vmem:[#allocation2 + $0xb0] sm:$0xff] 0.0
          %320 = vst [vmem:[#allocation2 + $0xb8] sm:$0xff] 0.0
          %321 = vst [vmem:[#allocation2 + $0xc0] sm:$0xff] 0.0
          %322 = vst [vmem:[#allocation2 + $0xc8] sm:$0xff] 0.0
          %323 = vst [vmem:[#allocation2 + $0xd0] sm:$0xff] 0.0
          %324 = vst [vmem:[#allocation2 + $0xd8] sm:$0xff] 0.0
          %325 = vst [vmem:[#allocation2 + $0xe0] sm:$0xff] 0.0
          %326 = vst [vmem:[#allocation2 + $0xe8] sm:$0xff] 0.0
          %327 = vst [vmem:[#allocation2 + $0xf0] sm:$0xff] 0.0
          %328 = vst [vmem:[#allocation2 + $0xf8] sm:$0xff] 0.0
        $region40: #{tpu_custom_call.1} parent=27 // pred_fallthru
          _
        %v329 = vld [vmem:[#allocation2] sm:$0xff]
        %v330 = vld [vmem:[#allocation2 + $0x8] sm:$0xff]
        %v331 = vld [vmem:[#allocation2 + $0x10] sm:$0xff]
        %v332 = vld [vmem:[#allocation2 + $0x18] sm:$0xff]
        %v333 = vld [vmem:[#allocation2 + $0x20] sm:$0xff]
        %v334 = vld [vmem:[#allocation2 + $0x28] sm:$0xff]
        %v335 = vld [vmem:[#allocation2 + $0x30] sm:$0xff]
        %v336 = vld [vmem:[#allocation2 + $0x38] sm:$0xff]
        %v337 = vld [vmem:[#allocation2 + $0x40] sm:$0xff]
        %v338 = vld [vmem:[#allocation2 + $0x48] sm:$0xff]
        %v339 = vld [vmem:[#allocation2 + $0x50] sm:$0xff]
        %v340 = vld [vmem:[#allocation2 + $0x58] sm:$0xff]
        %v341 = vld [vmem:[#allocation2 + $0x60] sm:$0xff]
        %v342 = vld [vmem:[#allocation2 + $0x68] sm:$0xff]
        %v343 = vld [vmem:[#allocation2 + $0x70] sm:$0xff]
        %v344 = vld [vmem:[#allocation2 + $0x78] sm:$0xff]
        %v345 = vld [vmem:[#allocation2 + $0x80] sm:$0xff]
        %v346 = vld [vmem:[#allocation2 + $0x88] sm:$0xff]
        %v347 = vld [vmem:[#allocation2 + $0x90] sm:$0xff]
        %v348 = vld [vmem:[#allocation2 + $0x98] sm:$0xff]
        %v349 = vld [vmem:[#allocation2 + $0xa0] sm:$0xff]
        %v350 = vld [vmem:[#allocation2 + $0xa8] sm:$0xff]
        %v351 = vld [vmem:[#allocation2 + $0xb0] sm:$0xff]
        %v352 = vld [vmem:[#allocation2 + $0xb8] sm:$0xff]
        %v353 = vld [vmem:[#allocation2 + $0xc0] sm:$0xff]
        %v354 = vld [vmem:[#allocation2 + $0xc8] sm:$0xff]
        %v355 = vld [vmem:[#allocation2 + $0xd0] sm:$0xff]
        %v356 = vld [vmem:[#allocation2 + $0xd8] sm:$0xff]
        %v357 = vld [vmem:[#allocation2 + $0xe0] sm:$0xff]
        %v358 = vld [vmem:[#allocation2 + $0xe8] sm:$0xff]
        %v359 = vld [vmem:[#allocation2 + $0xf0] sm:$0xff]
        %v360 = vld [vmem:[#allocation2 + $0xf8] sm:$0xff]
        %v361 = vld [vmem:[%s251] sm:$0xff]
        %v362 = vld [vmem:[%s251 + $0x8] sm:$0xff]
        %v363 = vld [vmem:[%s251 + $0x10] sm:$0xff]
        %v364 = vld [vmem:[%s251 + $0x18] sm:$0xff]
        %v365 = vld [vmem:[%s251 + $0x20] sm:$0xff]
        %v366 = vld [vmem:[%s251 + $0x28] sm:$0xff]
        %v367 = vld [vmem:[%s251 + $0x30] sm:$0xff]
        %v368 = vld [vmem:[%s251 + $0x38] sm:$0xff]
        %v369 = vld [vmem:[%s251 + $0x40] sm:$0xff]
        %v370 = vld [vmem:[%s251 + $0x48] sm:$0xff]
        %v371 = vld [vmem:[%s251 + $0x50] sm:$0xff]
        %v372 = vld [vmem:[%s251 + $0x58] sm:$0xff]
        %v373 = vld [vmem:[%s251 + $0x60] sm:$0xff]
        %v374 = vld [vmem:[%s251 + $0x68] sm:$0xff]
        %v375 = vld [vmem:[%s251 + $0x70] sm:$0xff]
        %v376 = vld [vmem:[%s251 + $0x78] sm:$0xff]
        %v377 = vld [vmem:[%s251 + $0x80] sm:$0xff]
        %v378 = vld [vmem:[%s251 + $0x88] sm:$0xff]
        %v379 = vld [vmem:[%s251 + $0x90] sm:$0xff]
        %v380 = vld [vmem:[%s251 + $0x98] sm:$0xff]
        %v381 = vld [vmem:[%s251 + $0xa0] sm:$0xff]
        %v382 = vld [vmem:[%s251 + $0xa8] sm:$0xff]
        %v383 = vld [vmem:[%s251 + $0xb0] sm:$0xff]
        %v384 = vld [vmem:[%s251 + $0xb8] sm:$0xff]
        %v385 = vld [vmem:[%s251 + $0xc0] sm:$0xff]
        %v386 = vld [vmem:[%s251 + $0xc8] sm:$0xff]
        %v387 = vld [vmem:[%s251 + $0xd0] sm:$0xff]
        %v388 = vld [vmem:[%s251 + $0xd8] sm:$0xff]
        %v389 = vld [vmem:[%s251 + $0xe0] sm:$0xff]
        %v390 = vld [vmem:[%s251 + $0xe8] sm:$0xff]
        %v391 = vld [vmem:[%s251 + $0xf0] sm:$0xff]
        %v392 = vld [vmem:[%s251 + $0xf8] sm:$0xff]
        %v393 = vld [vmem:[#allocation6] sm:$0xf]
        %v394 = vld [vmem:[#allocation6 + $0x4] sm:$0xf]
        %v395 = vld [vmem:[#allocation6 + $0x8] sm:$0xf]
        %v396 = vld [vmem:[#allocation6 + $0xc] sm:$0xf]
        %v397 = vld [vmem:[#allocation6 + $0x10] sm:$0xf]
        %v398 = vld [vmem:[#allocation6 + $0x14] sm:$0xf]
        %v399 = vld [vmem:[#allocation6 + $0x18] sm:$0xf]
        %v400 = vld [vmem:[#allocation6 + $0x1c] sm:$0xf]
        %v401 = vld [vmem:[#allocation6 + $0x20] sm:$0xf]
        %v402 = vld [vmem:[#allocation6 + $0x24] sm:$0xf]
        %v403 = vld [vmem:[#allocation6 + $0x28] sm:$0xf]
        %v404 = vld [vmem:[#allocation6 + $0x2c] sm:$0xf]
        %v405 = vld [vmem:[#allocation6 + $0x30] sm:$0xf]
        %v406 = vld [vmem:[#allocation6 + $0x34] sm:$0xf]
        %v407 = vld [vmem:[#allocation6 + $0x38] sm:$0xf]
        %v408 = vld [vmem:[#allocation6 + $0x3c] sm:$0xf]
        %v409 = vld [vmem:[#allocation6 + $0x40] sm:$0xf]
        %v410 = vld [vmem:[#allocation6 + $0x44] sm:$0xf]
        %v411 = vld [vmem:[#allocation6 + $0x48] sm:$0xf]
        %v412 = vld [vmem:[#allocation6 + $0x4c] sm:$0xf]
        %v413 = vld [vmem:[#allocation6 + $0x50] sm:$0xf]
        %v414 = vld [vmem:[#allocation6 + $0x54] sm:$0xf]
        %v415 = vld [vmem:[#allocation6 + $0x58] sm:$0xf]
        %v416 = vld [vmem:[#allocation6 + $0x5c] sm:$0xf]
        %v417 = vld [vmem:[#allocation6 + $0x60] sm:$0xf]
        %v418 = vld [vmem:[#allocation6 + $0x64] sm:$0xf]
        %v419 = vld [vmem:[#allocation6 + $0x68] sm:$0xf]
        %v420 = vld [vmem:[#allocation6 + $0x6c] sm:$0xf]
        %v421 = vld [vmem:[#allocation6 + $0x70] sm:$0xf]
        %v422 = vld [vmem:[#allocation6 + $0x74] sm:$0xf]
        %v423 = vld [vmem:[#allocation6 + $0x78] sm:$0xf]
        %v424 = vld [vmem:[#allocation6 + $0x7c] sm:$0xf]
        %v457 = vunpack.c.l.b16 %v361
        %v458 = vunpack.c.h.b16 %v361
        %v459 = vunpack.c.l.b16 %v362
        %v460 = vunpack.c.h.b16 %v362
        %v461 = vunpack.c.l.b16 %v363
        %v462 = vunpack.c.h.b16 %v363
        %v463 = vunpack.c.l.b16 %v364
        %v464 = vunpack.c.h.b16 %v364
        %v465 = vunpack.c.l.b16 %v365
        %v466 = vunpack.c.h.b16 %v365
        %v467 = vunpack.c.l.b16 %v366
        %v468 = vunpack.c.h.b16 %v366
        %v469 = vunpack.c.l.b16 %v367
        %v470 = vunpack.c.h.b16 %v367
        %v471 = vunpack.c.l.b16 %v368
        %v472 = vunpack.c.h.b16 %v368
        %v473 = vunpack.c.l.b16 %v369
        %v474 = vunpack.c.h.b16 %v369
        %v475 = vunpack.c.l.b16 %v370
        %v476 = vunpack.c.h.b16 %v370
        %v477 = vunpack.c.l.b16 %v371
        %v478 = vunpack.c.h.b16 %v371
        %v479 = vunpack.c.l.b16 %v372
        %v480 = vunpack.c.h.b16 %v372
        %v481 = vunpack.c.l.b16 %v373
        %v482 = vunpack.c.h.b16 %v373
        %v483 = vunpack.c.l.b16 %v374
        %v484 = vunpack.c.h.b16 %v374
        %v485 = vunpack.c.l.b16 %v375
        %v486 = vunpack.c.h.b16 %v375
        %v487 = vunpack.c.l.b16 %v376
        %v488 = vunpack.c.h.b16 %v376
        %v489 = vunpack.c.l.b16 %v377
        %v490 = vunpack.c.h.b16 %v377
        %v491 = vunpack.c.l.b16 %v378
        %v492 = vunpack.c.h.b16 %v378
        %v493 = vunpack.c.l.b16 %v379
        %v494 = vunpack.c.h.b16 %v379
        %v495 = vunpack.c.l.b16 %v380
        %v496 = vunpack.c.h.b16 %v380
        %v497 = vunpack.c.l.b16 %v381
        %v498 = vunpack.c.h.b16 %v381
        %v499 = vunpack.c.l.b16 %v382
        %v500 = vunpack.c.h.b16 %v382
        %v501 = vunpack.c.l.b16 %v383
        %v502 = vunpack.c.h.b16 %v383
        %v503 = vunpack.c.l.b16 %v384
        %v504 = vunpack.c.h.b16 %v384
        %v505 = vunpack.c.l.b16 %v385
        %v506 = vunpack.c.h.b16 %v385
        %v507 = vunpack.c.l.b16 %v386
        %v508 = vunpack.c.h.b16 %v386
        %v509 = vunpack.c.l.b16 %v387
        %v510 = vunpack.c.h.b16 %v387
        %v511 = vunpack.c.l.b16 %v388
        %v512 = vunpack.c.h.b16 %v388
        %v513 = vunpack.c.l.b16 %v389
        %v514 = vunpack.c.h.b16 %v389
        %v515 = vunpack.c.l.b16 %v390
        %v516 = vunpack.c.h.b16 %v390
        %v517 = vunpack.c.l.b16 %v391
        %v518 = vunpack.c.h.b16 %v391
        %v519 = vunpack.c.l.b16 %v392
        %v520 = vunpack.c.h.b16 %v392
        %v521 = vpack.c.b16 %v459, %v457
        %v522 = vpack.c.b16 %v460, %v458
        %v523 = vpack.c.b16 %v463, %v461
        %v524 = vpack.c.b16 %v464, %v462
        %v525 = vpack.c.b16 %v467, %v465
        %v526 = vpack.c.b16 %v468, %v466
        %v527 = vpack.c.b16 %v471, %v469
        %v528 = vpack.c.b16 %v472, %v470
        %v529 = vpack.c.b16 %v475, %v473
        %v530 = vpack.c.b16 %v476, %v474
        %v531 = vpack.c.b16 %v479, %v477
        %v532 = vpack.c.b16 %v480, %v478
        %v533 = vpack.c.b16 %v483, %v481
        %v534 = vpack.c.b16 %v484, %v482
        %v535 = vpack.c.b16 %v487, %v485
        %v536 = vpack.c.b16 %v488, %v486
        %v537 = vpack.c.b16 %v491, %v489
        %v538 = vpack.c.b16 %v492, %v490
        %v539 = vpack.c.b16 %v495, %v493
        %v540 = vpack.c.b16 %v496, %v494
        %v541 = vpack.c.b16 %v499, %v497
        %v542 = vpack.c.b16 %v500, %v498
        %v543 = vpack.c.b16 %v503, %v501
        %v544 = vpack.c.b16 %v504, %v502
        %v545 = vpack.c.b16 %v507, %v505
        %v546 = vpack.c.b16 %v508, %v506
        %v547 = vpack.c.b16 %v511, %v509
        %v548 = vpack.c.b16 %v512, %v510
        %v549 = vpack.c.b16 %v515, %v513
        %v550 = vpack.c.b16 %v516, %v514
        %v551 = vpack.c.b16 %v519, %v517
        %v552 = vpack.c.b16 %v520, %v518
        %v617 = vunpack.c.l.b16 %v393
        %v618 = vunpack.c.l.b16 %v394
        %v619 = vunpack.c.l.b16 %v395
        %v620 = vunpack.c.l.b16 %v396
        %v621 = vunpack.c.l.b16 %v397
        %v622 = vunpack.c.l.b16 %v398
        %v623 = vunpack.c.l.b16 %v399
        %v624 = vunpack.c.l.b16 %v400
        %v625 = vunpack.c.l.b16 %v401
        %v626 = vunpack.c.l.b16 %v402
        %v627 = vunpack.c.l.b16 %v403
        %v628 = vunpack.c.l.b16 %v404
        %v629 = vunpack.c.l.b16 %v405
        %v630 = vunpack.c.l.b16 %v406
        %v631 = vunpack.c.l.b16 %v407
        %v632 = vunpack.c.l.b16 %v408
        %v633 = vunpack.c.l.b16 %v409
        %v634 = vunpack.c.l.b16 %v410
        %v635 = vunpack.c.l.b16 %v411
        %v636 = vunpack.c.l.b16 %v412
        %v637 = vunpack.c.l.b16 %v413
        %v638 = vunpack.c.l.b16 %v414
        %v639 = vunpack.c.l.b16 %v415
        %v640 = vunpack.c.l.b16 %v416
        %v641 = vunpack.c.l.b16 %v417
        %v642 = vunpack.c.l.b16 %v418
        %v643 = vunpack.c.l.b16 %v419
        %v644 = vunpack.c.l.b16 %v420
        %v645 = vunpack.c.l.b16 %v421
        %v646 = vunpack.c.l.b16 %v422
        %v647 = vunpack.c.l.b16 %v423
        %v648 = vunpack.c.l.b16 %v424
        %v649 = vpack.c.b16 %v618, %v617
        %v650 = vpack.c.b16 %v620, %v619
        %v651 = vpack.c.b16 %v622, %v621
        %v652 = vpack.c.b16 %v624, %v623
        %v653 = vpack.c.b16 %v626, %v625
        %v654 = vpack.c.b16 %v628, %v627
        %v655 = vpack.c.b16 %v630, %v629
        %v656 = vpack.c.b16 %v632, %v631
        %v657 = vpack.c.b16 %v634, %v633
        %v658 = vpack.c.b16 %v636, %v635
        %v659 = vpack.c.b16 %v638, %v637
        %v660 = vpack.c.b16 %v640, %v639
        %v661 = vpack.c.b16 %v642, %v641
        %v662 = vpack.c.b16 %v644, %v643
        %v663 = vpack.c.b16 %v646, %v645
        %v664 = vpack.c.b16 %v648, %v647
        %681 = vmatprep.subr.bf16.mxu0 0
        %682 = vmatpush1.bf16.msra.mxu0 %v649
        %683 = vmatprep.subr.bf16.mxu0 0
        %684 = vmatpush1.bf16.msra.mxu0 %v650
        %685 = vmatprep.subr.bf16.mxu0 0
        %686 = vmatpush1.bf16.msra.mxu0 %v651
        %687 = vmatprep.subr.bf16.mxu0 0
        %688 = vmatpush1.bf16.msra.mxu0 %v652
        %689 = vmatprep.subr.bf16.mxu0 0
        %690 = vmatpush1.bf16.msra.mxu0 %v653
        %691 = vmatprep.subr.bf16.mxu0 0
        %692 = vmatpush1.bf16.msra.mxu0 %v654
        %693 = vmatprep.subr.bf16.mxu0 0
        %694 = vmatpush1.bf16.msra.mxu0 %v655
        %695 = vmatprep.subr.bf16.mxu0 0
        %696 = vmatpush1.bf16.msra.mxu0 %v656
        %697 = vmatprep.subr.bf16.mxu0 0
        %698 = vmatpush1.bf16.msra.mxu0 %v657
        %699 = vmatprep.subr.bf16.mxu0 0
        %700 = vmatpush1.bf16.msra.mxu0 %v658
        %701 = vmatprep.subr.bf16.mxu0 0
        %702 = vmatpush1.bf16.msra.mxu0 %v659
        %703 = vmatprep.subr.bf16.mxu0 0
        %704 = vmatpush1.bf16.msra.mxu0 %v660
        %705 = vmatprep.subr.bf16.mxu0 0
        %706 = vmatpush1.bf16.msra.mxu0 %v661
        %707 = vmatprep.subr.bf16.mxu0 0
        %708 = vmatpush1.bf16.msra.mxu0 %v662
        %709 = vmatprep.subr.bf16.mxu0 0
        %710 = vmatpush1.bf16.msra.mxu0 %v663
        %711 = vmatprep.subr.bf16.mxu0 0
        %712 = vmatpush1.bf16.msra.mxu0 %v664
        %713 = vmatprep.mubr.bf16.mxu0 %v522
        %714 = vmatmul.mubr.bf16.gmra.mrb[0].mxu0 %v521
        %v715 = vpop.f32.mrb[0].mxu0
        %v716 = vadd.f32 0.0, %v715
        %v717 = vpop.f32.mrb[0].mxu0
        %v718 = vpop.f32.mrb[0].mxu0
        %v719 = vadd.f32 0.0, %v718
        %v720 = vpop.f32.mrb[0].mxu0
        %721 = vmatprep.mubr.bf16.mxu0 %v524
        %722 = vmatmul.mubr.bf16.gmra.mrb[0].mxu0 %v523
        %v723 = vpop.f32.mrb[0].mxu0
        %v724 = vadd.f32 0.0, %v723
        %v725 = vpop.f32.mrb[0].mxu0
        %v726 = vpop.f32.mrb[0].mxu0
        %v727 = vadd.f32 0.0, %v726
        %v728 = vpop.f32.mrb[0].mxu0
        %729 = vmatprep.mubr.bf16.mxu0 %v526
        %730 = vmatmul.mubr.bf16.gmra.mrb[0].mxu0 %v525
        %v731 = vpop.f32.mrb[0].mxu0
        %v732 = vadd.f32 0.0, %v731
        %v733 = vpop.f32.mrb[0].mxu0
        %v734 = vpop.f32.mrb[0].mxu0
        %v735 = vadd.f32 0.0, %v734
        %v736 = vpop.f32.mrb[0].mxu0
        %737 = vmatprep.mubr.bf16.mxu0 %v528
        %738 = vmatmul.mubr.bf16.gmra.mrb[0].mxu0 %v527
        %v739 = vpop.f32.mrb[0].mxu0
        %v740 = vadd.f32 0.0, %v739
        %v741 = vpop.f32.mrb[0].mxu0
        %v742 = vpop.f32.mrb[0].mxu0
        %v743 = vadd.f32 0.0, %v742
        %v744 = vpop.f32.mrb[0].mxu0
        %745 = vmatprep.mubr.bf16.mxu0 %v530
        %746 = vmatmul.mubr.bf16.gmra.mrb[0].mxu0 %v529
        %v747 = vpop.f32.mrb[0].mxu0
        %v748 = vadd.f32 0.0, %v747
        %v749 = vpop.f32.mrb[0].mxu0
        %v750 = vpop.f32.mrb[0].mxu0
        %v751 = vadd.f32 0.0, %v750
        %v752 = vpop.f32.mrb[0].mxu0
        %753 = vmatprep.mubr.bf16.mxu0 %v532
        %754 = vmatmul.mubr.bf16.gmra.mrb[0].mxu0 %v531
        %v755 = vpop.f32.mrb[0].mxu0
        %v756 = vadd.f32 0.0, %v755
        %v757 = vpop.f32.mrb[0].mxu0
        %v758 = vpop.f32.mrb[0].mxu0
        %v759 = vadd.f32 0.0, %v758
        %v760 = vpop.f32.mrb[0].mxu0
        %761 = vmatprep.mubr.bf16.mxu0 %v534
        %762 = vmatmul.mubr.bf16.gmra.mrb[0].mxu0 %v533
        %v763 = vpop.f32.mrb[0].mxu0
        %v764 = vadd.f32 0.0, %v763
        %v765 = vpop.f32.mrb[0].mxu0
        %v766 = vpop.f32.mrb[0].mxu0
        %v767 = vadd.f32 0.0, %v766
        %v768 = vpop.f32.mrb[0].mxu0
        %769 = vmatprep.mubr.bf16.mxu0 %v536
        %770 = vmatmul.mubr.bf16.gmra.mrb[0].mxu0 %v535
        %v771 = vpop.f32.mrb[0].mxu0
        %v772 = vadd.f32 0.0, %v771
        %v773 = vpop.f32.mrb[0].mxu0
        %v774 = vpop.f32.mrb[0].mxu0
        %v775 = vadd.f32 0.0, %v774
        %v776 = vpop.f32.mrb[0].mxu0
        %777 = vmatprep.mubr.bf16.mxu0 %v538
        %778 = vmatmul.mubr.bf16.gmra.mrb[0].mxu0 %v537
        %v779 = vpop.f32.mrb[0].mxu0
        %v780 = vadd.f32 0.0, %v779
        %v781 = vpop.f32.mrb[0].mxu0
        %v782 = vpop.f32.mrb[0].mxu0
        %v783 = vadd.f32 0.0, %v782
        %v784 = vpop.f32.mrb[0].mxu0
        %785 = vmatprep.mubr.bf16.mxu0 %v540
        %786 = vmatmul.mubr.bf16.gmra.mrb[0].mxu0 %v539
        %v787 = vpop.f32.mrb[0].mxu0
        %v788 = vadd.f32 0.0, %v787
        %v789 = vpop.f32.mrb[0].mxu0
        %v790 = vpop.f32.mrb[0].mxu0
        %v791 = vadd.f32 0.0, %v790
        %v792 = vpop.f32.mrb[0].mxu0
        %793 = vmatprep.mubr.bf16.mxu0 %v542
        %794 = vmatmul.mubr.bf16.gmra.mrb[0].mxu0 %v541
        %v795 = vpop.f32.mrb[0].mxu0
        %v796 = vadd.f32 0.0, %v795
        %v797 = vpop.f32.mrb[0].mxu0
        %v798 = vpop.f32.mrb[0].mxu0
        %v799 = vadd.f32 0.0, %v798
        %v800 = vpop.f32.mrb[0].mxu0
        %801 = vmatprep.mubr.bf16.mxu0 %v544
        %802 = vmatmul.mubr.bf16.gmra.mrb[0].mxu0 %v543
        %v803 = vpop.f32.mrb[0].mxu0
        %v804 = vadd.f32 0.0, %v803
        %v805 = vpop.f32.mrb[0].mxu0
        %v806 = vpop.f32.mrb[0].mxu0
        %v807 = vadd.f32 0.0, %v806
        %v808 = vpop.f32.mrb[0].mxu0
        %809 = vmatprep.mubr.bf16.mxu0 %v546
        %810 = vmatmul.mubr.bf16.gmra.mrb[0].mxu0 %v545
        %v811 = vpop.f32.mrb[0].mxu0
        %v812 = vadd.f32 0.0, %v811
        %v813 = vpop.f32.mrb[0].mxu0
        %v814 = vpop.f32.mrb[0].mxu0
        %v815 = vadd.f32 0.0, %v814
        %v816 = vpop.f32.mrb[0].mxu0
        %817 = vmatprep.mubr.bf16.mxu0 %v548
        %818 = vmatmul.mubr.bf16.gmra.mrb[0].mxu0 %v547
        %v819 = vpop.f32.mrb[0].mxu0
        %v820 = vadd.f32 0.0, %v819
        %v821 = vpop.f32.mrb[0].mxu0
        %v822 = vpop.f32.mrb[0].mxu0
        %v823 = vadd.f32 0.0, %v822
        %v824 = vpop.f32.mrb[0].mxu0
        %825 = vmatprep.mubr.bf16.mxu0 %v550
        %826 = vmatmul.mubr.bf16.gmra.mrb[0].mxu0 %v549
        %v827 = vpop.f32.mrb[0].mxu0
        %v828 = vadd.f32 0.0, %v827
        %v829 = vpop.f32.mrb[0].mxu0
        %v830 = vpop.f32.mrb[0].mxu0
        %v831 = vadd.f32 0.0, %v830
        %v832 = vpop.f32.mrb[0].mxu0
        %833 = vmatprep.mubr.bf16.mxu0 %v552
        %834 = vmatmul.mubr.bf16.gmra.mrb[0].mxu0 %v551
        %v835 = vpop.f32.mrb[0].mxu0
        %v836 = vadd.f32 0.0, %v835
        %v837 = vpop.f32.mrb[0].mxu0
        %v838 = vpop.f32.mrb[0].mxu0
        %v839 = vadd.f32 0.0, %v838
        %v840 = vpop.f32.mrb[0].mxu0
        %841 = vdwg.mxu0
        %v842 = vadd.f32 %v329, %v716
        %v843 = vadd.f32 %v330, %v719
        %v844 = vadd.f32 %v331, %v724
        %v845 = vadd.f32 %v332, %v727
        %v846 = vadd.f32 %v333, %v732
        %v847 = vadd.f32 %v334, %v735
        %v848 = vadd.f32 %v335, %v740
        %v849 = vadd.f32 %v336, %v743
        %v850 = vadd.f32 %v337, %v748
        %v851 = vadd.f32 %v338, %v751
        %v852 = vadd.f32 %v339, %v756
        %v853 = vadd.f32 %v340, %v759
        %v854 = vadd.f32 %v341, %v764
        %v855 = vadd.f32 %v342, %v767
        %v856 = vadd.f32 %v343, %v772
        %v857 = vadd.f32 %v344, %v775
        %v858 = vadd.f32 %v345, %v780
        %v859 = vadd.f32 %v346, %v783
        %v860 = vadd.f32 %v347, %v788
        %v861 = vadd.f32 %v348, %v791
        %v862 = vadd.f32 %v349, %v796
        %v863 = vadd.f32 %v350, %v799
        %v864 = vadd.f32 %v351, %v804
        %v865 = vadd.f32 %v352, %v807
        %v866 = vadd.f32 %v353, %v812
        %v867 = vadd.f32 %v354, %v815
        %v868 = vadd.f32 %v355, %v820
        %v869 = vadd.f32 %v356, %v823
        %v870 = vadd.f32 %v357, %v828
        %v871 = vadd.f32 %v358, %v831
        %v872 = vadd.f32 %v359, %v836
        %v873 = vadd.f32 %v360, %v839
        %874 = vst [vmem:[#allocation2] sm:$0xff] %v842
        %875 = vst [vmem:[#allocation2 + $0x8] sm:$0xff] %v843
        %876 = vst [vmem:[#allocation2 + $0x10] sm:$0xff] %v844
        %877 = vst [vmem:[#allocation2 + $0x18] sm:$0xff] %v845
        %878 = vst [vmem:[#allocation2 + $0x20] sm:$0xff] %v846
        %879 = vst [vmem:[#allocation2 + $0x28] sm:$0xff] %v847
        %880 = vst [vmem:[#allocation2 + $0x30] sm:$0xff] %v848
        %881 = vst [vmem:[#allocation2 + $0x38] sm:$0xff] %v849
        %882 = vst [vmem:[#allocation2 + $0x40] sm:$0xff] %v850
        %883 = vst [vmem:[#allocation2 + $0x48] sm:$0xff] %v851
        %884 = vst [vmem:[#allocation2 + $0x50] sm:$0xff] %v852
        %885 = vst [vmem:[#allocation2 + $0x58] sm:$0xff] %v853
        %886 = vst [vmem:[#allocation2 + $0x60] sm:$0xff] %v854
        %887 = vst [vmem:[#allocation2 + $0x68] sm:$0xff] %v855
        %888 = vst [vmem:[#allocation2 + $0x70] sm:$0xff] %v856
        %889 = vst [vmem:[#allocation2 + $0x78] sm:$0xff] %v857
        %890 = vst [vmem:[#allocation2 + $0x80] sm:$0xff] %v858
        %891 = vst [vmem:[#allocation2 + $0x88] sm:$0xff] %v859
        %892 = vst [vmem:[#allocation2 + $0x90] sm:$0xff] %v860
        %893 = vst [vmem:[#allocation2 + $0x98] sm:$0xff] %v861
        %894 = vst [vmem:[#allocation2 + $0xa0] sm:$0xff] %v862
        %895 = vst [vmem:[#allocation2 + $0xa8] sm:$0xff] %v863
        %896 = vst [vmem:[#allocation2 + $0xb0] sm:$0xff] %v864
        %897 = vst [vmem:[#allocation2 + $0xb8] sm:$0xff] %v865
        %898 = vst [vmem:[#allocation2 + $0xc0] sm:$0xff] %v866
        %899 = vst [vmem:[#allocation2 + $0xc8] sm:$0xff] %v867
        %900 = vst [vmem:[#allocation2 + $0xd0] sm:$0xff] %v868
        %901 = vst [vmem:[#allocation2 + $0xd8] sm:$0xff] %v869
        %902 = vst [vmem:[#allocation2 + $0xe0] sm:$0xff] %v870
        %903 = vst [vmem:[#allocation2 + $0xe8] sm:$0xff] %v871
        %904 = vst [vmem:[#allocation2 + $0xf0] sm:$0xff] %v872
        %905 = vst [vmem:[#allocation2 + $0xf8] sm:$0xff] %v873
        // Predicated region
        $region41: #{tpu_custom_call.1} parent=27 // pred_check
          %p906 = pneg %p293
        $region42: #{tpu_custom_call.1} parent=27 // pred_check_branch
          %908 = sbr.rel (%p906) target = $region44
        $region43: #{tpu_custom_call.1} parent=27 // pred_region
          %v909 = vld [vmem:[#allocation2] sm:$0xff]
          %v910 = vld [vmem:[#allocation2 + $0x8] sm:$0xff]
          %v911 = vld [vmem:[#allocation2 + $0x10] sm:$0xff]
          %v912 = vld [vmem:[#allocation2 + $0x18] sm:$0xff]
          %v913 = vld [vmem:[#allocation2 + $0x20] sm:$0xff]
          %v914 = vld [vmem:[#allocation2 + $0x28] sm:$0xff]
          %v915 = vld [vmem:[#allocation2 + $0x30] sm:$0xff]
          %v916 = vld [vmem:[#allocation2 + $0x38] sm:$0xff]
          %v917 = vld [vmem:[#allocation2 + $0x40] sm:$0xff]
          %v918 = vld [vmem:[#allocation2 + $0x48] sm:$0xff]
          %v919 = vld [vmem:[#allocation2 + $0x50] sm:$0xff]
          %v920 = vld [vmem:[#allocation2 + $0x58] sm:$0xff]
          %v921 = vld [vmem:[#allocation2 + $0x60] sm:$0xff]
          %v922 = vld [vmem:[#allocation2 + $0x68] sm:$0xff]
          %v923 = vld [vmem:[#allocation2 + $0x70] sm:$0xff]
          %v924 = vld [vmem:[#allocation2 + $0x78] sm:$0xff]
          %v925 = vld [vmem:[#allocation2 + $0x80] sm:$0xff]
          %v926 = vld [vmem:[#allocation2 + $0x88] sm:$0xff]
          %v927 = vld [vmem:[#allocation2 + $0x90] sm:$0xff]
          %v928 = vld [vmem:[#allocation2 + $0x98] sm:$0xff]
          %v929 = vld [vmem:[#allocation2 + $0xa0] sm:$0xff]
          %v930 = vld [vmem:[#allocation2 + $0xa8] sm:$0xff]
          %v931 = vld [vmem:[#allocation2 + $0xb0] sm:$0xff]
          %v932 = vld [vmem:[#allocation2 + $0xb8] sm:$0xff]
          %v933 = vld [vmem:[#allocation2 + $0xc0] sm:$0xff]
          %v934 = vld [vmem:[#allocation2 + $0xc8] sm:$0xff]
          %v935 = vld [vmem:[#allocation2 + $0xd0] sm:$0xff]
          %v936 = vld [vmem:[#allocation2 + $0xd8] sm:$0xff]
          %v937 = vld [vmem:[#allocation2 + $0xe0] sm:$0xff]
          %v938 = vld [vmem:[#allocation2 + $0xe8] sm:$0xff]
          %v939 = vld [vmem:[#allocation2 + $0xf0] sm:$0xff]
          %v940 = vld [vmem:[#allocation2 + $0xf8] sm:$0xff]
          %v941 = vpack.c.bf16 %v910, %v909
          %v942 = vpack.c.bf16 %v912, %v911
          %v943 = vpack.c.bf16 %v914, %v913
          %v944 = vpack.c.bf16 %v916, %v915
          %v945 = vpack.c.bf16 %v918, %v917
          %v946 = vpack.c.bf16 %v920, %v919
          %v947 = vpack.c.bf16 %v922, %v921
          %v948 = vpack.c.bf16 %v924, %v923
          %v949 = vpack.c.bf16 %v926, %v925
          %v950 = vpack.c.bf16 %v928, %v927
          %v951 = vpack.c.bf16 %v930, %v929
          %v952 = vpack.c.bf16 %v932, %v931
          %v953 = vpack.c.bf16 %v934, %v933
          %v954 = vpack.c.bf16 %v936, %v935
          %v955 = vpack.c.bf16 %v938, %v937
          %v956 = vpack.c.bf16 %v940, %v939
          %v973 = vunpack.c.l.b16 %v941
          %v974 = vunpack.c.h.b16 %v941
          %v975 = vunpack.c.l.b16 %v942
          %v976 = vunpack.c.h.b16 %v942
          %v977 = vunpack.c.l.b16 %v943
          %v978 = vunpack.c.h.b16 %v943
          %v979 = vunpack.c.l.b16 %v944
          %v980 = vunpack.c.h.b16 %v944
          %v981 = vunpack.c.l.b16 %v945
          %v982 = vunpack.c.h.b16 %v945
          %v983 = vunpack.c.l.b16 %v946
          %v984 = vunpack.c.h.b16 %v946
          %v985 = vunpack.c.l.b16 %v947
          %v986 = vunpack.c.h.b16 %v947
          %v987 = vunpack.c.l.b16 %v948
          %v988 = vunpack.c.h.b16 %v948
          %v989 = vunpack.c.l.b16 %v949
          %v990 = vunpack.c.h.b16 %v949
          %v991 = vunpack.c.l.b16 %v950
          %v992 = vunpack.c.h.b16 %v950
          %v993 = vunpack.c.l.b16 %v951
          %v994 = vunpack.c.h.b16 %v951
          %v995 = vunpack.c.l.b16 %v952
          %v996 = vunpack.c.h.b16 %v952
          %v997 = vunpack.c.l.b16 %v953
          %v998 = vunpack.c.h.b16 %v953
          %v999 = vunpack.c.l.b16 %v954
          %v1000 = vunpack.c.h.b16 %v954
          %v1001 = vunpack.c.l.b16 %v955
          %v1002 = vunpack.c.h.b16 %v955
          %v1003 = vunpack.c.l.b16 %v956
          %v1004 = vunpack.c.h.b16 %v956
          %v1005 = vpack.c.b16 %v973, %v973
          %v1006 = vpack.c.b16 %v974, %v974
          %v1007 = vpack.c.b16 %v975, %v975
          %v1008 = vpack.c.b16 %v976, %v976
          %v1009 = vpack.c.b16 %v977, %v977
          %v1010 = vpack.c.b16 %v978, %v978
          %v1011 = vpack.c.b16 %v979, %v979
          %v1012 = vpack.c.b16 %v980, %v980
          %v1013 = vpack.c.b16 %v981, %v981
          %v1014 = vpack.c.b16 %v982, %v982
          %v1015 = vpack.c.b16 %v983, %v983
          %v1016 = vpack.c.b16 %v984, %v984
          %v1017 = vpack.c.b16 %v985, %v985
          %v1018 = vpack.c.b16 %v986, %v986
          %v1019 = vpack.c.b16 %v987, %v987
          %v1020 = vpack.c.b16 %v988, %v988
          %v1021 = vpack.c.b16 %v989, %v989
          %v1022 = vpack.c.b16 %v990, %v990
          %v1023 = vpack.c.b16 %v991, %v991
          %v1024 = vpack.c.b16 %v992, %v992
          %v1025 = vpack.c.b16 %v993, %v993
          %v1026 = vpack.c.b16 %v994, %v994
          %v1027 = vpack.c.b16 %v995, %v995
          %v1028 = vpack.c.b16 %v996, %v996
          %v1029 = vpack.c.b16 %v997, %v997
          %v1030 = vpack.c.b16 %v998, %v998
          %v1031 = vpack.c.b16 %v999, %v999
          %v1032 = vpack.c.b16 %v1000, %v1000
          %v1033 = vpack.c.b16 %v1001, %v1001
          %v1034 = vpack.c.b16 %v1002, %v1002
          %v1035 = vpack.c.b16 %v1003, %v1003
          %v1036 = vpack.c.b16 %v1004, %v1004
          %1069 = vst [vmem:[%s275] sm:$0xf] %v1005
          %1070 = vst [vmem:[%s275 + $0x4] sm:$0xf] %v1006
          %1071 = vst [vmem:[%s275 + $0x8] sm:$0xf] %v1007
          %1072 = vst [vmem:[%s275 + $0xc] sm:$0xf] %v1008
          %1073 = vst [vmem:[%s275 + $0x10] sm:$0xf] %v1009
          %1074 = vst [vmem:[%s275 + $0x14] sm:$0xf] %v1010
          %1075 = vst [vmem:[%s275 + $0x18] sm:$0xf] %v1011
          %1076 = vst [vmem:[%s275 + $0x1c] sm:$0xf] %v1012
          %1077 = vst [vmem:[%s275 + $0x20] sm:$0xf] %v1013
          %1078 = vst [vmem:[%s275 + $0x24] sm:$0xf] %v1014
          %1079 = vst [vmem:[%s275 + $0x28] sm:$0xf] %v1015
          %1080 = vst [vmem:[%s275 + $0x2c] sm:$0xf] %v1016
          %1081 = vst [vmem:[%s275 + $0x30] sm:$0xf] %v1017
          %1082 = vst [vmem:[%s275 + $0x34] sm:$0xf] %v1018
          %1083 = vst [vmem:[%s275 + $0x38] sm:$0xf] %v1019
          %1084 = vst [vmem:[%s275 + $0x3c] sm:$0xf] %v1020
          %1085 = vst [vmem:[%s275 + $0x40] sm:$0xf] %v1021
          %1086 = vst [vmem:[%s275 + $0x44] sm:$0xf] %v1022
          %1087 = vst [vmem:[%s275 + $0x48] sm:$0xf] %v1023
          %1088 = vst [vmem:[%s275 + $0x4c] sm:$0xf] %v1024
          %1089 = vst [vmem:[%s275 + $0x50] sm:$0xf] %v1025
          %1090 = vst [vmem:[%s275 + $0x54] sm:$0xf] %v1026
          %1091 = vst [vmem:[%s275 + $0x58] sm:$0xf] %v1027
          %1092 = vst [vmem:[%s275 + $0x5c] sm:$0xf] %v1028
          %1093 = vst [vmem:[%s275 + $0x60] sm:$0xf] %v1029
          %1094 = vst [vmem:[%s275 + $0x64] sm:$0xf] %v1030
          %1095 = vst [vmem:[%s275 + $0x68] sm:$0xf] %v1031
          %1096 = vst [vmem:[%s275 + $0x6c] sm:$0xf] %v1032
          %1097 = vst [vmem:[%s275 + $0x70] sm:$0xf] %v1033
          %1098 = vst [vmem:[%s275 + $0x74] sm:$0xf] %v1034
          %1099 = vst [vmem:[%s275 + $0x78] sm:$0xf] %v1035
          %1100 = vst [vmem:[%s275 + $0x7c] sm:$0xf] %v1036
          %v1101 = vadd.f32 %v909, %v910
          %v1102 = vadd.f32 %v1101, %v911
          %v1103 = vadd.f32 %v1102, %v912
          %v1104 = vadd.f32 %v1103, %v913
          %v1105 = vadd.f32 %v1104, %v914
          %v1106 = vadd.f32 %v1105, %v915
          %v1107 = vadd.f32 %v1106, %v916
          %v1108 = vadd.f32 %v1107, %v917
          %v1109 = vadd.f32 %v1108, %v918
          %v1110 = vadd.f32 %v1109, %v919
          %v1111 = vadd.f32 %v1110, %v920
          %v1112 = vadd.f32 %v1111, %v921
          %v1113 = vadd.f32 %v1112, %v922
          %v1114 = vadd.f32 %v1113, %v923
          %v1115 = vadd.f32 %v1114, %v924
          %v1116 = vadd.f32 %v1115, %v925
          %v1117 = vadd.f32 %v1116, %v926
          %v1118 = vadd.f32 %v1117, %v927
          %v1119 = vadd.f32 %v1118, %v928
          %v1120 = vadd.f32 %v1119, %v929
          %v1121 = vadd.f32 %v1120, %v930
          %v1122 = vadd.f32 %v1121, %v931
          %v1123 = vadd.f32 %v1122, %v932
          %v1124 = vadd.f32 %v1123, %v933
          %v1125 = vadd.f32 %v1124, %v934
          %v1126 = vadd.f32 %v1125, %v935
          %v1127 = vadd.f32 %v1126, %v936
          %v1128 = vadd.f32 %v1127, %v937
          %v1129 = vadd.f32 %v1128, %v938
          %v1130 = vadd.f32 %v1129, %v939
          %v1131 = vadd.f32 %v1130, %v940
          %v1132 = vrot.slane %v1131, 4
          %v1133 = vadd.f32 %v1131, %v1132
          %v1134 = vrot.slane %v1133, 2
          %v1135 = vadd.f32 %v1133, %v1134
          %v1136 = vrot.slane %v1135, 1
          %v1137 = vadd.f32 %v1135, %v1136
          %1138 = vst [vmem:[%s281] sm:$0x1] %v1137
          %v1139 = vmul.f32 %v909, %v909
          %v1140 = vmul.f32 %v910, %v910
          %v1141 = vmul.f32 %v911, %v911
          %v1142 = vmul.f32 %v912, %v912
          %v1143 = vmul.f32 %v913, %v913
          %v1144 = vmul.f32 %v914, %v914
          %v1145 = vmul.f32 %v915, %v915
          %v1146 = vmul.f32 %v916, %v916
          %v1147 = vmul.f32 %v917, %v917
          %v1148 = vmul.f32 %v918, %v918
          %v1149 = vmul.f32 %v919, %v919
          %v1150 = vmul.f32 %v920, %v920
          %v1151 = vmul.f32 %v921, %v921
          %v1152 = vmul.f32 %v922, %v922
          %v1153 = vmul.f32 %v923, %v923
          %v1154 = vmul.f32 %v924, %v924
          %v1155 = vmul.f32 %v925, %v925
          %v1156 = vmul.f32 %v926, %v926
          %v1157 = vmul.f32 %v927, %v927
          %v1158 = vmul.f32 %v928, %v928
          %v1159 = vmul.f32 %v929, %v929
          %v1160 = vmul.f32 %v930, %v930
          %v1161 = vmul.f32 %v931, %v931
          %v1162 = vmul.f32 %v932, %v932
          %v1163 = vmul.f32 %v933, %v933
          %v1164 = vmul.f32 %v934, %v934
          %v1165 = vmul.f32 %v935, %v935
          %v1166 = vmul.f32 %v936, %v936
          %v1167 = vmul.f32 %v937, %v937
          %v1168 = vmul.f32 %v938, %v938
          %v1169 = vmul.f32 %v939, %v939
          %v1170 = vmul.f32 %v940, %v940
          %v1171 = vadd.f32 %v1139, %v1140
          %v1172 = vadd.f32 %v1171, %v1141
          %v1173 = vadd.f32 %v1172, %v1142
          %v1174 = vadd.f32 %v1173, %v1143
          %v1175 = vadd.f32 %v1174, %v1144
          %v1176 = vadd.f32 %v1175, %v1145
          %v1177 = vadd.f32 %v1176, %v1146
          %v1178 = vadd.f32 %v1177, %v1147
          %v1179 = vadd.f32 %v1178, %v1148
          %v1180 = vadd.f32 %v1179, %v1149
          %v1181 = vadd.f32 %v1180, %v1150
          %v1182 = vadd.f32 %v1181, %v1151
          %v1183 = vadd.f32 %v1182, %v1152
          %v1184 = vadd.f32 %v1183, %v1153
          %v1185 = vadd.f32 %v1184, %v1154
          %v1186 = vadd.f32 %v1185, %v1155
          %v1187 = vadd.f32 %v1186, %v1156
          %v1188 = vadd.f32 %v1187, %v1157
          %v1189 = vadd.f32 %v1188, %v1158
          %v1190 = vadd.f32 %v1189, %v1159
          %v1191 = vadd.f32 %v1190, %v1160
          %v1192 = vadd.f32 %v1191, %v1161
          %v1193 = vadd.f32 %v1192, %v1162
          %v1194 = vadd.f32 %v1193, %v1163
          %v1195 = vadd.f32 %v1194, %v1164
          %v1196 = vadd.f32 %v1195, %v1165
          %v1197 = vadd.f32 %v1196, %v1166
          %v1198 = vadd.f32 %v1197, %v1167
          %v1199 = vadd.f32 %v1198, %v1168
          %v1200 = vadd.f32 %v1199, %v1169
          %v1201 = vadd.f32 %v1200, %v1170
          %v1202 = vrot.slane %v1201, 4
          %v1203 = vadd.f32 %v1201, %v1202
          %v1204 = vrot.slane %v1203, 2
          %v1205 = vadd.f32 %v1203, %v1204
          %v1206 = vrot.slane %v1205, 1
          %v1207 = vadd.f32 %v1205, %v1206
          %1208 = vst [vmem:[%s287] sm:$0x1] %v1207
        $region44: #{tpu_custom_call.1} parent=27 // pred_fallthru
          _
        %s1209 = sand.u32 %s111, 1
        %s1210 = scalar_lea.sflag [#allocation5], %s1209
        %s1211 = sand.u32 %s111, 1
        %s1212 = smul.addr %s1211, 128
        %s1213 = scalar_lea.vmem [#allocation8], %s1212
        %s1214 = sand.u32 %s26, 1
        %s1215 = scalar_lea.sflag [#allocation10], %s1214
        %s1216 = sand.u32 %s139, 1
        %s1217 = scalar_lea.vmem [#allocation9], %s1216
        %s1218 = sand.u32 %s26, 1
        %s1219 = scalar_lea.sflag [#allocation10], %s1218
        %s1220 = sand.u32 %s167, 1
        %s1221 = scalar_lea.vmem [#allocation11], %s1220
        // Predicated region
        $region45: #{tpu_custom_call.1} parent=27 // pred_check
          %p1222 = pneg %p121
        $region46: #{tpu_custom_call.1} parent=27 // pred_check_branch
          %1224 = sbr.rel (%p1222) target = $region48
        $region47: #{tpu_custom_call.1} parent=27 // pred_region
          %s1225 = smul.u32 32, %s31
          %s1227 = ssub.s32 2048, 2048
          %1228 = vsyncadd %s1210, %s1227
          %s1229 = sadd.s32 %s32, %s1225
          %s1230 = smul.addr %s1229, 64
          %s1231 = scalar_lea.hbm %s2, %s1230
          %s1232 = sshll.u32 %s1213, 4
          %s1233 = int_to_ptr.vmem [resolvable:$true] %s1232
          %1238 = dma.vmem_to_hbm [thread:$0]  %s1233, 2048, %s1231, %s1210, 64, 64, 4
        $region48: #{tpu_custom_call.1} parent=27 // pred_fallthru
          _
        // Predicated region
        $region49: #{tpu_custom_call.1} parent=27 // pred_check
          %p1239 = pneg %p149
        $region50: #{tpu_custom_call.1} parent=27 // pred_check_branch
          %1241 = sbr.rel (%p1239) target = $region52
        $region51: #{tpu_custom_call.1} parent=27 // pred_region
          %s1243 = ssub.s32 16, 16
          %1244 = vsyncadd %s1215, %s1243
          %s1245 = sadd.s32 %s32, %s31
          %s1246 = smul.addr %s1245, 16
          %s1247 = scalar_lea.hbm %s3, %s1246
          %s1249 = sshll.u32 %s1217, 4
          %s1250 = int_to_ptr.vmem [resolvable:$true] %s1249
          %1252 = dma.vmem_to_hbm [thread:$0]  %s1250, 16, %s1247, %s1215
        $region52: #{tpu_custom_call.1} parent=27 // pred_fallthru
          _
        // Predicated region
        $region53: #{tpu_custom_call.1} parent=27 // pred_check
          %p1253 = pneg %p177
        $region54: #{tpu_custom_call.1} parent=27 // pred_check_branch
          %1255 = sbr.rel (%p1253) target = $region56
        $region55: #{tpu_custom_call.1} parent=27 // pred_region
          %s1257 = ssub.s32 16, 16
          %1258 = vsyncadd %s1219, %s1257
          %s1259 = sadd.s32 %s32, %s31
          %s1260 = smul.addr %s1259, 16
          %s1261 = scalar_lea.hbm %s4, %s1260
          %s1263 = sshll.u32 %s1221, 4
          %s1264 = int_to_ptr.vmem [resolvable:$true] %s1263
          %1266 = dma.vmem_to_hbm [thread:$0]  %s1264, 16, %s1261, %s1219
        $region56: #{tpu_custom_call.1} parent=27 // pred_fallthru
          _
      $region28: #{tpu_custom_call.1} parent=5 // pred_fallthru
        _
      %p1267 = scmp.le.s32.totalorder 2, %s21
      // Predicated region
      $region57: #{tpu_custom_call.1} parent=5 // pred_check
        %p1268 = pneg %p1267
      $region58: #{tpu_custom_call.1} parent=5 // pred_check_branch
        %1270 = sbr.rel (%p1268) target = $region60
      $region59: #{tpu_custom_call.1} parent=5 // pred_region
        %s1271 = ssub.s32 %s21, 2
        // Predicated region
        $region61: #{tpu_custom_call.1} parent=59 // pred_check
          %p1272 = pneg %p127
        $region62: #{tpu_custom_call.1} parent=59 // pred_check_branch
          %1274 = sbr.rel (%p1272) target = $region64
        $region63: #{tpu_custom_call.1} parent=59 // pred_region
          %s1275 = sand.u32 %s112, 1
          %s1276 = scalar_lea.sflag [#allocation5], %s1275
          %s1277 = sand.u32 %s112, 1
          %s1278 = smul.addr %s1277, 128
          %s1279 = scalar_lea.vmem [#allocation8], %s1278
          %1280 = dma.done %s1276, 2048
        $region64: #{tpu_custom_call.1} parent=59 // pred_fallthru
          _
        // Predicated region
        $region65: #{tpu_custom_call.1} parent=59 // pred_check
          %p1281 = pneg %p155
        $region66: #{tpu_custom_call.1} parent=59 // pred_check_branch
          %1283 = sbr.rel (%p1281) target = $region68
        $region67: #{tpu_custom_call.1} parent=59 // pred_region
          %s1284 = sand.u32 %s27, 1
          %s1285 = scalar_lea.sflag [#allocation10], %s1284
          %s1286 = sand.u32 %s140, 1
          %s1287 = scalar_lea.vmem [#allocation9], %s1286
          %1288 = dma.done %s1285, 16
        $region68: #{tpu_custom_call.1} parent=59 // pred_fallthru
          _
        // Predicated region
        $region69: #{tpu_custom_call.1} parent=59 // pred_check
          %p1289 = pneg %p183
        $region70: #{tpu_custom_call.1} parent=59 // pred_check_branch
          %1291 = sbr.rel (%p1289) target = $region72
        $region71: #{tpu_custom_call.1} parent=59 // pred_region
          %s1292 = sand.u32 %s27, 1
          %s1293 = scalar_lea.sflag [#allocation10], %s1292
          %s1294 = sand.u32 %s168, 1
          %s1295 = scalar_lea.vmem [#allocation11], %s1294
          %1296 = dma.done %s1293, 16
        $region72: #{tpu_custom_call.1} parent=59 // pred_fallthru
          _
      $region60: #{tpu_custom_call.1} parent=5 // pred_fallthru
        _
    $region6: #{tpu_custom_call.1} parent=1 // loop_footer
      %s25 = sadd.s32 1, %s21
    $region7: #{tpu_custom_call.1} parent=1 // loop_footer_branch
      %20 = sbr.rel target = $region3
    $region8: #{tpu_custom_call.1} parent=1 // loop_exit
      _
    %1297 = vsyncpa [#allocation4], 1
    %s1298 = scalar_lea.sflag [#allocation4], 1
    %1299 = vsyncpa %s1298, 1
    %1300 = vsyncpa [#allocation7], 1
    %1301 = vsyncpa [#allocation5], 1
    %s1302 = scalar_lea.sflag [#allocation5], 1
    %1303 = vsyncpa %s1302, 1
    %1304 = vsyncpa [#allocation10], 1
    %s1305 = scalar_lea.sflag [#allocation10], 1
    %1306 = vsyncpa %s1305, 1

</llo_original>
